<compile_context>
chip_gen: v7x
topology: tpu7x:2x2x1
jax: 0.10.0
libtpu: 0.0.40
codegen_flags: <defaults>
</compile_context>

<pallas_src>
import jax
import jax.numpy as jnp
import numpy as np
from jax import lax
from jax.experimental import pallas as pl
from jax.experimental.pallas import tpu as pltpu

# ---- problem sizes (hidden size fixed by the PyTorch module) ----
B = 2                  # batch
T = 16                 # sequence length
H = 100                # LSTM hidden size (nn.LSTM(1, 100))
HP = 128               # hidden size padded to a full vreg lane group
NUM_CLASSES = 5


def lstm_kernel(xtb_ref, wih_ref, whh_ref, bl_ref, wf_ref, bf_ref, out_ref):
    f32 = jnp.float32
    bf16 = jnp.bfloat16

    x_tb = xtb_ref[...]          # (T, B)      f32
    wih = wih_ref[...]           # (1, 4*HP)   f32, gate-padded W_ih.T, i/f/o cols pre-scaled by 0.5
    whh = whh_ref[...]           # (HP, 4*HP)  bf16, gate/row padded W_hh.T, i/f/o cols pre-scaled by 0.5
    bl = bl_ref[...]             # (1, 4*HP)   f32, gate-padded (b_ih+b_hh), i/f/o pre-scaled by 0.5

    # Hoisted input-gate contribution for every time step: (T, B, 4*HP).
    # Computed once (vectorized) so the recurrence body carries no broadcasts.
    xg = x_tb[:, :, None] * wih[None, :, :] + bl[None, :, :]

    h = jnp.zeros((B, HP), f32)
    c = jnp.zeros((B, HP), f32)
    for t in range(T):           # T is small & static -> unrolled, full LLO visibility
        # bf16 MXU operands, f32 accumulate; whh is loop-invariant (weight-stationary).
        gates = xg[t] + jnp.dot(h.astype(bf16), whh, preferred_element_type=f32)  # (B, 4*HP)

        # Single unified tanh over all 4 gate blocks (1 EUP push instead of 4).
        # i/f/o columns were pre-scaled by 0.5, so sigmoid(z) = 0.5*tanh(z/2)+0.5
        # is recovered with a constant FMA; the g block is plain tanh.
        tg = jnp.tanh(gates)
        i_g = 0.5 * tg[:, 0 * HP:1 * HP] + 0.5       # lane-aligned slices
        f_g = 0.5 * tg[:, 1 * HP:2 * HP] + 0.5
        g_g = tg[:, 2 * HP:3 * HP]
        o_g = 0.5 * tg[:, 3 * HP:4 * HP] + 0.5

        c = f_g * c + i_g * g_g
        h = o_g * jnp.tanh(c)

    # fc: Linear(100, NUM_CLASSES) + Softmax(dim=1), whole batch, single store.
    logits = jnp.dot(h, wf_ref[...], preferred_element_type=f32) + bf_ref[...]
    m = jnp.max(logits, axis=1, keepdims=True)
    e = jnp.exp(logits - m)
    out_ref[...] = e / jnp.sum(e, axis=1, keepdims=True)


# ------------------------- one-time parameter packing ------------------------
def _pad_and_scale_gates(a, h=H, hp=HP):
    """(..., 4*h) -> (..., 4*hp): zero-pad each gate block to hp lanes and
    pre-scale the i/f/o blocks by 0.5 (gate order i,f,g,o)."""
    scale = jnp.array([0.5, 0.5, 1.0, 0.5], jnp.float32)[:, None]   # (4, 1)
    lead = a.shape[:-1]
    a4 = a.reshape(lead + (4, h)) * scale
    pad = [(0, 0)] * len(lead) + [(0, 0), (0, hp - h)]
    return jnp.pad(a4, pad).reshape(lead + (4 * hp,))


def prepare_params(params):
    """Model-load-time packing: padding, transposes, 0.5 gate pre-scale, bf16
    cast of the recurrent weight.  Called once; NOT on the per-call path."""
    wih = _pad_and_scale_gates(params["lstm_wih"][:, 0])[None, :]               # (1, 4*HP) f32
    whh = _pad_and_scale_gates(params["lstm_whh"].T)                            # (H, 4*HP)
    whh = jnp.pad(whh, ((0, HP - H), (0, 0))).astype(jnp.bfloat16)              # (HP, 4*HP) bf16
    bl = _pad_and_scale_gates(params["lstm_bih"] + params["lstm_bhh"])[None, :]  # (1, 4*HP) f32
    wf = jnp.pad(params["fc_w"].T, ((0, HP - H), (0, 0)))                       # (HP, NC) f32
    bf = params["fc_b"][None, :]                                                # (1, NC)  f32
    return (wih, whh, bl, wf, bf)


@jax.jit
def lstm_forward(x, packed):
    """x: (B, T, 1) float32, packed = prepare_params(...)  ->  (B, NUM_CLASSES)."""
    x_tb = x[:, :, 0].T                                             # (T, B)
    vmem = pl.BlockSpec(memory_space=pltpu.MemorySpace.VMEM)
    # Single grid point: the model is ~0.3 MiB and latency-bound by the serial
    # recurrence; no tiling/pipelining, and (per review) no cross-TC split of
    # B=2 on v7x — the weight push would just be duplicated.
    return pl.pallas_call(
        lstm_kernel,
        out_shape=jax.ShapeDtypeStruct((B, NUM_CLASSES), jnp.float32),
        in_specs=[vmem] * 6,
        out_specs=vmem,
    )(x_tb, *packed)


# ----------------------------- pure-JAX reference ----------------------------
def reference_forward(x, params):
    hp = lax.Precision.HIGHEST
    wih, whh = params["lstm_wih"], params["lstm_whh"]
    bih, bhh = params["lstm_bih"], params["lstm_bhh"]
    h = jnp.zeros((B, H), jnp.float32)
    c = jnp.zeros((B, H), jnp.float32)
    for t in range(T):
        gates = (jnp.dot(x[:, t, :], wih.T, precision=hp)
                 + jnp.dot(h, whh.T, precision=hp) + bih + bhh)
        i = jax.nn.sigmoid(gates[:, :H])
        f = jax.nn.sigmoid(gates[:, H:2 * H])
        g = jnp.tanh(gates[:, 2 * H:3 * H])
        o = jax.nn.sigmoid(gates[:, 3 * H:])
        c = f * c + i * g
        h = o * jnp.tanh(c)
    logits = jnp.dot(h, params["fc_w"].T, precision=hp) + params["fc_b"]
    return jax.nn.softmax(logits, axis=1)


if __name__ == "__main__":
    key = jax.random.PRNGKey(0)
    keys = jax.random.split(key, 8)
    # Deterministic synthetic parameters in PyTorch layouts (gate order i,f,g,o).
    params = {
        "lstm_wih": 0.10 * jax.random.normal(keys[0], (4 * H, 1), jnp.float32),
        "lstm_whh": 0.10 * jax.random.normal(keys[1], (4 * H, H), jnp.float32),
        "lstm_bih": 0.10 * jax.random.normal(keys[2], (4 * H,), jnp.float32),
        "lstm_bhh": 0.10 * jax.random.normal(keys[3], (4 * H,), jnp.float32),
        "fc_w": 0.10 * jax.random.normal(keys[4], (NUM_CLASSES, H), jnp.float32),
        "fc_b": 0.10 * jax.random.normal(keys[5], (NUM_CLASSES,), jnp.float32),
    }
    x = jax.random.normal(keys[6], (B, T, 1), jnp.float32)

    packed = jax.block_until_ready(prepare_params(params))   # one-time packing

    out = jax.block_until_ready(lstm_forward(x, packed))
    ref = jax.block_until_ready(reference_forward(x, params))

    assert out.shape == (B, NUM_CLASSES)
    # Tolerance accounts for bf16 MXU operands on the recurrent dot (f32 accumulate,
    # f32 elementwise state math); reference is full f32 Precision.HIGHEST.
    np.testing.assert_allclose(np.asarray(out), np.asarray(ref), atol=1e-2, rtol=1e-2)
    print("KERNEL_OK")
</pallas_src>

<mosaic_0001>
module attributes {stable_mosaic.version = 11 : i64} {
  func.func @lstm_kernel(%arg0: memref<16x2xf32, #tpu.memory_space<vmem>>, %arg1: memref<1x512xf32, #tpu.memory_space<vmem>>, %arg2: memref<128x512xbf16, #tpu.memory_space<vmem>>, %arg3: memref<1x512xf32, #tpu.memory_space<vmem>>, %arg4: memref<128x5xf32, #tpu.memory_space<vmem>>, %arg5: memref<1x5xf32, #tpu.memory_space<vmem>>, %arg6: memref<2x5xf32, #tpu.memory_space<vmem>>) attributes {dimension_semantics = [], scalar_prefetch = 0 : i64, scratch_operands = 0 : i64, tpu.core_type = #tpu.core_type<tc>} {
    %c0 = arith.constant 0 : index
    %c0_0 = arith.constant 0 : index
    %0 = vector.load %arg0[%c0, %c0_0] : memref<16x2xf32, #tpu.memory_space<vmem>>, vector<16x2xf32>
    %c0_1 = arith.constant 0 : index
    %c0_2 = arith.constant 0 : index
    %1 = vector.load %arg1[%c0_1, %c0_2] : memref<1x512xf32, #tpu.memory_space<vmem>>, vector<1x512xf32>
    %c0_3 = arith.constant 0 : index
    %c0_4 = arith.constant 0 : index
    %2 = vector.load %arg2[%c0_3, %c0_4] : memref<128x512xbf16, #tpu.memory_space<vmem>>, vector<128x512xbf16>
    %c0_5 = arith.constant 0 : index
    %c0_6 = arith.constant 0 : index
    %3 = vector.load %arg3[%c0_5, %c0_6] : memref<1x512xf32, #tpu.memory_space<vmem>>, vector<1x512xf32>
    %4 = vector.shape_cast %0 : vector<16x2xf32> to vector<16x2x1xf32>
    %5 = vector.shape_cast %1 : vector<1x512xf32> to vector<1x1x512xf32>
    %6 = vector.broadcast %4 : vector<16x2x1xf32> to vector<16x2x512xf32>
    %7 = vector.broadcast %5 : vector<1x1x512xf32> to vector<16x2x512xf32>
    %8 = arith.mulf %6, %7 : vector<16x2x512xf32>
    %9 = vector.shape_cast %3 : vector<1x512xf32> to vector<1x1x512xf32>
    %10 = vector.broadcast %9 : vector<1x1x512xf32> to vector<16x2x512xf32>
    %11 = arith.addf %8, %10 : vector<16x2x512xf32>
    %cst = arith.constant 0.000000e+00 : f32
    %12 = vector.broadcast %cst : f32 to vector<2x128xf32>
    %cst_7 = arith.constant 0.000000e+00 : f32
    %13 = vector.broadcast %cst_7 : f32 to vector<2x128xf32>
    %14 = vector.extract_strided_slice %11 {offsets = [0, 0, 0], sizes = [1, 2, 512], strides = [1, 1, 1]} : vector<16x2x512xf32> to vector<1x2x512xf32>
    %15 = vector.shape_cast %14 : vector<1x2x512xf32> to vector<2x512xf32>
    %16 = arith.truncf %12 : vector<2x128xf32> to vector<2x128xbf16>
    %cst_8 = arith.constant dense<0.000000e+00> : vector<2x512xf32>
    %17 = tpu.matmul %16, %2, %cst_8 {dimension_numbers = #tpu.dot_dimension_numbers<[1], [0], [0], [1], [0, 0, 1, 1], [], []>} : vector<2x128xbf16>, vector<128x512xbf16>, vector<2x512xf32> -> vector<2x512xf32>
    %18 = arith.addf %15, %17 : vector<2x512xf32>
    %19 = math.tanh %18 : vector<2x512xf32>
    %20 = vector.extract_strided_slice %19 {offsets = [0, 0], sizes = [2, 128], strides = [1, 1]} : vector<2x512xf32> to vector<2x128xf32>
    %cst_9 = arith.constant 5.000000e-01 : f32
    %21 = vector.broadcast %cst_9 : f32 to vector<2x128xf32>
    %22 = arith.mulf %21, %20 : vector<2x128xf32>
    %cst_10 = arith.constant 5.000000e-01 : f32
    %23 = vector.broadcast %cst_10 : f32 to vector<2x128xf32>
    %24 = arith.addf %22, %23 : vector<2x128xf32>
    %25 = vector.extract_strided_slice %19 {offsets = [0, 128], sizes = [2, 128], strides = [1, 1]} : vector<2x512xf32> to vector<2x128xf32>
    %cst_11 = arith.constant 5.000000e-01 : f32
    %26 = vector.broadcast %cst_11 : f32 to vector<2x128xf32>
    %27 = arith.mulf %26, %25 : vector<2x128xf32>
    %cst_12 = arith.constant 5.000000e-01 : f32
    %28 = vector.broadcast %cst_12 : f32 to vector<2x128xf32>
    %29 = arith.addf %27, %28 : vector<2x128xf32>
    %30 = vector.extract_strided_slice %19 {offsets = [0, 256], sizes = [2, 128], strides = [1, 1]} : vector<2x512xf32> to vector<2x128xf32>
    %31 = vector.extract_strided_slice %19 {offsets = [0, 384], sizes = [2, 128], strides = [1, 1]} : vector<2x512xf32> to vector<2x128xf32>
    %cst_13 = arith.constant 5.000000e-01 : f32
    %32 = vector.broadcast %cst_13 : f32 to vector<2x128xf32>
    %33 = arith.mulf %32, %31 : vector<2x128xf32>
    %cst_14 = arith.constant 5.000000e-01 : f32
    %34 = vector.broadcast %cst_14 : f32 to vector<2x128xf32>
    %35 = arith.addf %33, %34 : vector<2x128xf32>
    %36 = arith.mulf %29, %13 : vector<2x128xf32>
    %37 = arith.mulf %24, %30 : vector<2x128xf32>
    %38 = arith.addf %36, %37 : vector<2x128xf32>
    %39 = math.tanh %38 : vector<2x128xf32>
    %40 = arith.mulf %35, %39 : vector<2x128xf32>
    %41 = vector.extract_strided_slice %11 {offsets = [1, 0, 0], sizes = [1, 2, 512], strides = [1, 1, 1]} : vector<16x2x512xf32> to vector<1x2x512xf32>
    %42 = vector.shape_cast %41 : vector<1x2x512xf32> to vector<2x512xf32>
    %43 = arith.truncf %40 : vector<2x128xf32> to vector<2x128xbf16>
    %cst_15 = arith.constant dense<0.000000e+00> : vector<2x512xf32>
    %44 = tpu.matmul %43, %2, %cst_15 {dimension_numbers = #tpu.dot_dimension_numbers<[1], [0], [0], [1], [0, 0, 1, 1], [], []>} : vector<2x128xbf16>, vector<128x512xbf16>, vector<2x512xf32> -> vector<2x512xf32>
    %45 = arith.addf %42, %44 : vector<2x512xf32>
    %46 = math.tanh %45 : vector<2x512xf32>
    %47 = vector.extract_strided_slice %46 {offsets = [0, 0], sizes = [2, 128], strides = [1, 1]} : vector<2x512xf32> to vector<2x128xf32>
    %cst_16 = arith.constant 5.000000e-01 : f32
    %48 = vector.broadcast %cst_16 : f32 to vector<2x128xf32>
    %49 = arith.mulf %48, %47 : vector<2x128xf32>
    %cst_17 = arith.constant 5.000000e-01 : f32
    %50 = vector.broadcast %cst_17 : f32 to vector<2x128xf32>
    %51 = arith.addf %49, %50 : vector<2x128xf32>
    %52 = vector.extract_strided_slice %46 {offsets = [0, 128], sizes = [2, 128], strides = [1, 1]} : vector<2x512xf32> to vector<2x128xf32>
    %cst_18 = arith.constant 5.000000e-01 : f32
    %53 = vector.broadcast %cst_18 : f32 to vector<2x128xf32>
    %54 = arith.mulf %53, %52 : vector<2x128xf32>
    %cst_19 = arith.constant 5.000000e-01 : f32
    %55 = vector.broadcast %cst_19 : f32 to vector<2x128xf32>
    %56 = arith.addf %54, %55 : vector<2x128xf32>
    %57 = vector.extract_strided_slice %46 {offsets = [0, 256], sizes = [2, 128], strides = [1, 1]} : vector<2x512xf32> to vector<2x128xf32>
    %58 = vector.extract_strided_slice %46 {offsets = [0, 384], sizes = [2, 128], strides = [1, 1]} : vector<2x512xf32> to vector<2x128xf32>
    %cst_20 = arith.constant 5.000000e-01 : f32
    %59 = vector.broadcast %cst_20 : f32 to vector<2x128xf32>
    %60 = arith.mulf %59, %58 : vector<2x128xf32>
    %cst_21 = arith.constant 5.000000e-01 : f32
    %61 = vector.broadcast %cst_21 : f32 to vector<2x128xf32>
    %62 = arith.addf %60, %61 : vector<2x128xf32>
    %63 = arith.mulf %56, %38 : vector<2x128xf32>
    %64 = arith.mulf %51, %57 : vector<2x128xf32>
    %65 = arith.addf %63, %64 : vector<2x128xf32>
    %66 = math.tanh %65 : vector<2x128xf32>
    %67 = arith.mulf %62, %66 : vector<2x128xf32>
    %68 = vector.extract_strided_slice %11 {offsets = [2, 0, 0], sizes = [1, 2, 512], strides = [1, 1, 1]} : vector<16x2x512xf32> to vector<1x2x512xf32>
    %69 = vector.shape_cast %68 : vector<1x2x512xf32> to vector<2x512xf32>
    %70 = arith.truncf %67 : vector<2x128xf32> to vector<2x128xbf16>
    %cst_22 = arith.constant dense<0.000000e+00> : vector<2x512xf32>
    %71 = tpu.matmul %70, %2, %cst_22 {dimension_numbers = #tpu.dot_dimension_numbers<[1], [0], [0], [1], [0, 0, 1, 1], [], []>} : vector<2x128xbf16>, vector<128x512xbf16>, vector<2x512xf32> -> vector<2x512xf32>
    %72 = arith.addf %69, %71 : vector<2x512xf32>
    %73 = math.tanh %72 : vector<2x512xf32>
    %74 = vector.extract_strided_slice %73 {offsets = [0, 0], sizes = [2, 128], strides = [1, 1]} : vector<2x512xf32> to vector<2x128xf32>
    %cst_23 = arith.constant 5.000000e-01 : f32
    %75 = vector.broadcast %cst_23 : f32 to vector<2x128xf32>
    %76 = arith.mulf %75, %74 : vector<2x128xf32>
    %cst_24 = arith.constant 5.000000e-01 : f32
    %77 = vector.broadcast %cst_24 : f32 to vector<2x128xf32>
    %78 = arith.addf %76, %77 : vector<2x128xf32>
    %79 = vector.extract_strided_slice %73 {offsets = [0, 128], sizes = [2, 128], strides = [1, 1]} : vector<2x512xf32> to vector<2x128xf32>
    %cst_25 = arith.constant 5.000000e-01 : f32
    %80 = vector.broadcast %cst_25 : f32 to vector<2x128xf32>
    %81 = arith.mulf %80, %79 : vector<2x128xf32>
    %cst_26 = arith.constant 5.000000e-01 : f32
    %82 = vector.broadcast %cst_26 : f32 to vector<2x128xf32>
    %83 = arith.addf %81, %82 : vector<2x128xf32>
    %84 = vector.extract_strided_slice %73 {offsets = [0, 256], sizes = [2, 128], strides = [1, 1]} : vector<2x512xf32> to vector<2x128xf32>
    %85 = vector.extract_strided_slice %73 {offsets = [0, 384], sizes = [2, 128], strides = [1, 1]} : vector<2x512xf32> to vector<2x128xf32>
    %cst_27 = arith.constant 5.000000e-01 : f32
    %86 = vector.broadcast %cst_27 : f32 to vector<2x128xf32>
    %87 = arith.mulf %86, %85 : vector<2x128xf32>
    %cst_28 = arith.constant 5.000000e-01 : f32
    %88 = vector.broadcast %cst_28 : f32 to vector<2x128xf32>
    %89 = arith.addf %87, %88 : vector<2x128xf32>
    %90 = arith.mulf %83, %65 : vector<2x128xf32>
    %91 = arith.mulf %78, %84 : vector<2x128xf32>
    %92 = arith.addf %90, %91 : vector<2x128xf32>
    %93 = math.tanh %92 : vector<2x128xf32>
    %94 = arith.mulf %89, %93 : vector<2x128xf32>
    %95 = vector.extract_strided_slice %11 {offsets = [3, 0, 0], sizes = [1, 2, 512], strides = [1, 1, 1]} : vector<16x2x512xf32> to vector<1x2x512xf32>
    %96 = vector.shape_cast %95 : vector<1x2x512xf32> to vector<2x512xf32>
    %97 = arith.truncf %94 : vector<2x128xf32> to vector<2x128xbf16>
    %cst_29 = arith.constant dense<0.000000e+00> : vector<2x512xf32>
    %98 = tpu.matmul %97, %2, %cst_29 {dimension_numbers = #tpu.dot_dimension_numbers<[1], [0], [0], [1], [0, 0, 1, 1], [], []>} : vector<2x128xbf16>, vector<128x512xbf16>, vector<2x512xf32> -> vector<2x512xf32>
    %99 = arith.addf %96, %98 : vector<2x512xf32>
    %100 = math.tanh %99 : vector<2x512xf32>
    %101 = vector.extract_strided_slice %100 {offsets = [0, 0], sizes = [2, 128], strides = [1, 1]} : vector<2x512xf32> to vector<2x128xf32>
    %cst_30 = arith.constant 5.000000e-01 : f32
    %102 = vector.broadcast %cst_30 : f32 to vector<2x128xf32>
    %103 = arith.mulf %102, %101 : vector<2x128xf32>
    %cst_31 = arith.constant 5.000000e-01 : f32
    %104 = vector.broadcast %cst_31 : f32 to vector<2x128xf32>
    %105 = arith.addf %103, %104 : vector<2x128xf32>
    %106 = vector.extract_strided_slice %100 {offsets = [0, 128], sizes = [2, 128], strides = [1, 1]} : vector<2x512xf32> to vector<2x128xf32>
    %cst_32 = arith.constant 5.000000e-01 : f32
    %107 = vector.broadcast %cst_32 : f32 to vector<2x128xf32>
    %108 = arith.mulf %107, %106 : vector<2x128xf32>
    %cst_33 = arith.constant 5.000000e-01 : f32
    %109 = vector.broadcast %cst_33 : f32 to vector<2x128xf32>
    %110 = arith.addf %108, %109 : vector<2x128xf32>
    %111 = vector.extract_strided_slice %100 {offsets = [0, 256], sizes = [2, 128], strides = [1, 1]} : vector<2x512xf32> to vector<2x128xf32>
    %112 = vector.extract_strided_slice %100 {offsets = [0, 384], sizes = [2, 128], strides = [1, 1]} : vector<2x512xf32> to vector<2x128xf32>
    %cst_34 = arith.constant 5.000000e-01 : f32
    %113 = vector.broadcast %cst_34 : f32 to vector<2x128xf32>
    %114 = arith.mulf %113, %112 : vector<2x128xf32>
    %cst_35 = arith.constant 5.000000e-01 : f32
    %115 = vector.broadcast %cst_35 : f32 to vector<2x128xf32>
    %116 = arith.addf %114, %115 : vector<2x128xf32>
    %117 = arith.mulf %110, %92 : vector<2x128xf32>
    %118 = arith.mulf %105, %111 : vector<2x128xf32>
    %119 = arith.addf %117, %118 : vector<2x128xf32>
    %120 = math.tanh %119 : vector<2x128xf32>
    %121 = arith.mulf %116, %120 : vector<2x128xf32>
    %122 = vector.extract_strided_slice %11 {offsets = [4, 0, 0], sizes = [1, 2, 512], strides = [1, 1, 1]} : vector<16x2x512xf32> to vector<1x2x512xf32>
    %123 = vector.shape_cast %122 : vector<1x2x512xf32> to vector<2x512xf32>
    %124 = arith.truncf %121 : vector<2x128xf32> to vector<2x128xbf16>
    %cst_36 = arith.constant dense<0.000000e+00> : vector<2x512xf32>
    %125 = tpu.matmul %124, %2, %cst_36 {dimension_numbers = #tpu.dot_dimension_numbers<[1], [0], [0], [1], [0, 0, 1, 1], [], []>} : vector<2x128xbf16>, vector<128x512xbf16>, vector<2x512xf32> -> vector<2x512xf32>
    %126 = arith.addf %123, %125 : vector<2x512xf32>
    %127 = math.tanh %126 : vector<2x512xf32>
    %128 = vector.extract_strided_slice %127 {offsets = [0, 0], sizes = [2, 128], strides = [1, 1]} : vector<2x512xf32> to vector<2x128xf32>
    %cst_37 = arith.constant 5.000000e-01 : f32
    %129 = vector.broadcast %cst_37 : f32 to vector<2x128xf32>
    %130 = arith.mulf %129, %128 : vector<2x128xf32>
    %cst_38 = arith.constant 5.000000e-01 : f32
    %131 = vector.broadcast %cst_38 : f32 to vector<2x128xf32>
    %132 = arith.addf %130, %131 : vector<2x128xf32>
    %133 = vector.extract_strided_slice %127 {offsets = [0, 128], sizes = [2, 128], strides = [1, 1]} : vector<2x512xf32> to vector<2x128xf32>
    %cst_39 = arith.constant 5.000000e-01 : f32
    %134 = vector.broadcast %cst_39 : f32 to vector<2x128xf32>
    %135 = arith.mulf %134, %133 : vector<2x128xf32>
    %cst_40 = arith.constant 5.000000e-01 : f32
    %136 = vector.broadcast %cst_40 : f32 to vector<2x128xf32>
    %137 = arith.addf %135, %136 : vector<2x128xf32>
    %138 = vector.extract_strided_slice %127 {offsets = [0, 256], sizes = [2, 128], strides = [1, 1]} : vector<2x512xf32> to vector<2x128xf32>
    %139 = vector.extract_strided_slice %127 {offsets = [0, 384], sizes = [2, 128], strides = [1, 1]} : vector<2x512xf32> to vector<2x128xf32>
    %cst_41 = arith.constant 5.000000e-01 : f32
    %140 = vector.broadcast %cst_41 : f32 to vector<2x128xf32>
    %141 = arith.mulf %140, %139 : vector<2x128xf32>
    %cst_42 = arith.constant 5.000000e-01 : f32
    %142 = vector.broadcast %cst_42 : f32 to vector<2x128xf32>
    %143 = arith.addf %141, %142 : vector<2x128xf32>
    %144 = arith.mulf %137, %119 : vector<2x128xf32>
    %145 = arith.mulf %132, %138 : vector<2x128xf32>
    %146 = arith.addf %144, %145 : vector<2x128xf32>
    %147 = math.tanh %146 : vector<2x128xf32>
    %148 = arith.mulf %143, %147 : vector<2x128xf32>
    %149 = vector.extract_strided_slice %11 {offsets = [5, 0, 0], sizes = [1, 2, 512], strides = [1, 1, 1]} : vector<16x2x512xf32> to vector<1x2x512xf32>
    %150 = vector.shape_cast %149 : vector<1x2x512xf32> to vector<2x512xf32>
    %151 = arith.truncf %148 : vector<2x128xf32> to vector<2x128xbf16>
    %cst_43 = arith.constant dense<0.000000e+00> : vector<2x512xf32>
    %152 = tpu.matmul %151, %2, %cst_43 {dimension_numbers = #tpu.dot_dimension_numbers<[1], [0], [0], [1], [0, 0, 1, 1], [], []>} : vector<2x128xbf16>, vector<128x512xbf16>, vector<2x512xf32> -> vector<2x512xf32>
    %153 = arith.addf %150, %152 : vector<2x512xf32>
    %154 = math.tanh %153 : vector<2x512xf32>
    %155 = vector.extract_strided_slice %154 {offsets = [0, 0], sizes = [2, 128], strides = [1, 1]} : vector<2x512xf32> to vector<2x128xf32>
    %cst_44 = arith.constant 5.000000e-01 : f32
    %156 = vector.broadcast %cst_44 : f32 to vector<2x128xf32>
    %157 = arith.mulf %156, %155 : vector<2x128xf32>
    %cst_45 = arith.constant 5.000000e-01 : f32
    %158 = vector.broadcast %cst_45 : f32 to vector<2x128xf32>
    %159 = arith.addf %157, %158 : vector<2x128xf32>
    %160 = vector.extract_strided_slice %154 {offsets = [0, 128], sizes = [2, 128], strides = [1, 1]} : vector<2x512xf32> to vector<2x128xf32>
    %cst_46 = arith.constant 5.000000e-01 : f32
    %161 = vector.broadcast %cst_46 : f32 to vector<2x128xf32>
    %162 = arith.mulf %161, %160 : vector<2x128xf32>
    %cst_47 = arith.constant 5.000000e-01 : f32
    %163 = vector.broadcast %cst_47 : f32 to vector<2x128xf32>
    %164 = arith.addf %162, %163 : vector<2x128xf32>
    %165 = vector.extract_strided_slice %154 {offsets = [0, 256], sizes = [2, 128], strides = [1, 1]} : vector<2x512xf32> to vector<2x128xf32>
    %166 = vector.extract_strided_slice %154 {offsets = [0, 384], sizes = [2, 128], strides = [1, 1]} : vector<2x512xf32> to vector<2x128xf32>
    %cst_48 = arith.constant 5.000000e-01 : f32
    %167 = vector.broadcast %cst_48 : f32 to vector<2x128xf32>
    %168 = arith.mulf %167, %166 : vector<2x128xf32>
    %cst_49 = arith.constant 5.000000e-01 : f32
    %169 = vector.broadcast %cst_49 : f32 to vector<2x128xf32>
    %170 = arith.addf %168, %169 : vector<2x128xf32>
    %171 = arith.mulf %164, %146 : vector<2x128xf32>
    %172 = arith.mulf %159, %165 : vector<2x128xf32>
    %173 = arith.addf %171, %172 : vector<2x128xf32>
    %174 = math.tanh %173 : vector<2x128xf32>
    %175 = arith.mulf %170, %174 : vector<2x128xf32>
    %176 = vector.extract_strided_slice %11 {offsets = [6, 0, 0], sizes = [1, 2, 512], strides = [1, 1, 1]} : vector<16x2x512xf32> to vector<1x2x512xf32>
    %177 = vector.shape_cast %176 : vector<1x2x512xf32> to vector<2x512xf32>
    %178 = arith.truncf %175 : vector<2x128xf32> to vector<2x128xbf16>
    %cst_50 = arith.constant dense<0.000000e+00> : vector<2x512xf32>
    %179 = tpu.matmul %178, %2, %cst_50 {dimension_numbers = #tpu.dot_dimension_numbers<[1], [0], [0], [1], [0, 0, 1, 1], [], []>} : vector<2x128xbf16>, vector<128x512xbf16>, vector<2x512xf32> -> vector<2x512xf32>
    %180 = arith.addf %177, %179 : vector<2x512xf32>
    %181 = math.tanh %180 : vector<2x512xf32>
    %182 = vector.extract_strided_slice %181 {offsets = [0, 0], sizes = [2, 128], strides = [1, 1]} : vector<2x512xf32> to vector<2x128xf32>
    %cst_51 = arith.constant 5.000000e-01 : f32
    %183 = vector.broadcast %cst_51 : f32 to vector<2x128xf32>
    %184 = arith.mulf %183, %182 : vector<2x128xf32>
    %cst_52 = arith.constant 5.000000e-01 : f32
    %185 = vector.broadcast %cst_52 : f32 to vector<2x128xf32>
    %186 = arith.addf %184, %185 : vector<2x128xf32>
    %187 = vector.extract_strided_slice %181 {offsets = [0, 128], sizes = [2, 128], strides = [1, 1]} : vector<2x512xf32> to vector<2x128xf32>
    %cst_53 = arith.constant 5.000000e-01 : f32
    %188 = vector.broadcast %cst_53 : f32 to vector<2x128xf32>
    %189 = arith.mulf %188, %187 : vector<2x128xf32>
    %cst_54 = arith.constant 5.000000e-01 : f32
    %190 = vector.broadcast %cst_54 : f32 to vector<2x128xf32>
    %191 = arith.addf %189, %190 : vector<2x128xf32>
    %192 = vector.extract_strided_slice %181 {offsets = [0, 256], sizes = [2, 128], strides = [1, 1]} : vector<2x512xf32> to vector<2x128xf32>
    %193 = vector.extract_strided_slice %181 {offsets = [0, 384], sizes = [2, 128], strides = [1, 1]} : vector<2x512xf32> to vector<2x128xf32>
    %cst_55 = arith.constant 5.000000e-01 : f32
    %194 = vector.broadcast %cst_55 : f32 to vector<2x128xf32>
    %195 = arith.mulf %194, %193 : vector<2x128xf32>
    %cst_56 = arith.constant 5.000000e-01 : f32
    %196 = vector.broadcast %cst_56 : f32 to vector<2x128xf32>
    %197 = arith.addf %195, %196 : vector<2x128xf32>
    %198 = arith.mulf %191, %173 : vector<2x128xf32>
    %199 = arith.mulf %186, %192 : vector<2x128xf32>
    %200 = arith.addf %198, %199 : vector<2x128xf32>
    %201 = math.tanh %200 : vector<2x128xf32>
    %202 = arith.mulf %197, %201 : vector<2x128xf32>
    %203 = vector.extract_strided_slice %11 {offsets = [7, 0, 0], sizes = [1, 2, 512], strides = [1, 1, 1]} : vector<16x2x512xf32> to vector<1x2x512xf32>
    %204 = vector.shape_cast %203 : vector<1x2x512xf32> to vector<2x512xf32>
    %205 = arith.truncf %202 : vector<2x128xf32> to vector<2x128xbf16>
    %cst_57 = arith.constant dense<0.000000e+00> : vector<2x512xf32>
    %206 = tpu.matmul %205, %2, %cst_57 {dimension_numbers = #tpu.dot_dimension_numbers<[1], [0], [0], [1], [0, 0, 1, 1], [], []>} : vector<2x128xbf16>, vector<128x512xbf16>, vector<2x512xf32> -> vector<2x512xf32>
    %207 = arith.addf %204, %206 : vector<2x512xf32>
    %208 = math.tanh %207 : vector<2x512xf32>
    %209 = vector.extract_strided_slice %208 {offsets = [0, 0], sizes = [2, 128], strides = [1, 1]} : vector<2x512xf32> to vector<2x128xf32>
    %cst_58 = arith.constant 5.000000e-01 : f32
    %210 = vector.broadcast %cst_58 : f32 to vector<2x128xf32>
    %211 = arith.mulf %210, %209 : vector<2x128xf32>
    %cst_59 = arith.constant 5.000000e-01 : f32
    %212 = vector.broadcast %cst_59 : f32 to vector<2x128xf32>
    %213 = arith.addf %211, %212 : vector<2x128xf32>
    %214 = vector.extract_strided_slice %208 {offsets = [0, 128], sizes = [2, 128], strides = [1, 1]} : vector<2x512xf32> to vector<2x128xf32>
    %cst_60 = arith.constant 5.000000e-01 : f32
    %215 = vector.broadcast %cst_60 : f32 to vector<2x128xf32>
    %216 = arith.mulf %215, %214 : vector<2x128xf32>
    %cst_61 = arith.constant 5.000000e-01 : f32
    %217 = vector.broadcast %cst_61 : f32 to vector<2x128xf32>
    %218 = arith.addf %216, %217 : vector<2x128xf32>
    %219 = vector.extract_strided_slice %208 {offsets = [0, 256], sizes = [2, 128], strides = [1, 1]} : vector<2x512xf32> to vector<2x128xf32>
    %220 = vector.extract_strided_slice %208 {offsets = [0, 384], sizes = [2, 128], strides = [1, 1]} : vector<2x512xf32> to vector<2x128xf32>
    %cst_62 = arith.constant 5.000000e-01 : f32
    %221 = vector.broadcast %cst_62 : f32 to vector<2x128xf32>
    %222 = arith.mulf %221, %220 : vector<2x128xf32>
    %cst_63 = arith.constant 5.000000e-01 : f32
    %223 = vector.broadcast %cst_63 : f32 to vector<2x128xf32>
    %224 = arith.addf %222, %223 : vector<2x128xf32>
    %225 = arith.mulf %218, %200 : vector<2x128xf32>
    %226 = arith.mulf %213, %219 : vector<2x128xf32>
    %227 = arith.addf %225, %226 : vector<2x128xf32>
    %228 = math.tanh %227 : vector<2x128xf32>
    %229 = arith.mulf %224, %228 : vector<2x128xf32>
    %230 = vector.extract_strided_slice %11 {offsets = [8, 0, 0], sizes = [1, 2, 512], strides = [1, 1, 1]} : vector<16x2x512xf32> to vector<1x2x512xf32>
    %231 = vector.shape_cast %230 : vector<1x2x512xf32> to vector<2x512xf32>
    %232 = arith.truncf %229 : vector<2x128xf32> to vector<2x128xbf16>
    %cst_64 = arith.constant dense<0.000000e+00> : vector<2x512xf32>
    %233 = tpu.matmul %232, %2, %cst_64 {dimension_numbers = #tpu.dot_dimension_numbers<[1], [0], [0], [1], [0, 0, 1, 1], [], []>} : vector<2x128xbf16>, vector<128x512xbf16>, vector<2x512xf32> -> vector<2x512xf32>
    %234 = arith.addf %231, %233 : vector<2x512xf32>
    %235 = math.tanh %234 : vector<2x512xf32>
    %236 = vector.extract_strided_slice %235 {offsets = [0, 0], sizes = [2, 128], strides = [1, 1]} : vector<2x512xf32> to vector<2x128xf32>
    %cst_65 = arith.constant 5.000000e-01 : f32
    %237 = vector.broadcast %cst_65 : f32 to vector<2x128xf32>
    %238 = arith.mulf %237, %236 : vector<2x128xf32>
    %cst_66 = arith.constant 5.000000e-01 : f32
    %239 = vector.broadcast %cst_66 : f32 to vector<2x128xf32>
    %240 = arith.addf %238, %239 : vector<2x128xf32>
    %241 = vector.extract_strided_slice %235 {offsets = [0, 128], sizes = [2, 128], strides = [1, 1]} : vector<2x512xf32> to vector<2x128xf32>
    %cst_67 = arith.constant 5.000000e-01 : f32
    %242 = vector.broadcast %cst_67 : f32 to vector<2x128xf32>
    %243 = arith.mulf %242, %241 : vector<2x128xf32>
    %cst_68 = arith.constant 5.000000e-01 : f32
    %244 = vector.broadcast %cst_68 : f32 to vector<2x128xf32>
    %245 = arith.addf %243, %244 : vector<2x128xf32>
    %246 = vector.extract_strided_slice %235 {offsets = [0, 256], sizes = [2, 128], strides = [1, 1]} : vector<2x512xf32> to vector<2x128xf32>
    %247 = vector.extract_strided_slice %235 {offsets = [0, 384], sizes = [2, 128], strides = [1, 1]} : vector<2x512xf32> to vector<2x128xf32>
    %cst_69 = arith.constant 5.000000e-01 : f32
    %248 = vector.broadcast %cst_69 : f32 to vector<2x128xf32>
    %249 = arith.mulf %248, %247 : vector<2x128xf32>
    %cst_70 = arith.constant 5.000000e-01 : f32
    %250 = vector.broadcast %cst_70 : f32 to vector<2x128xf32>
    %251 = arith.addf %249, %250 : vector<2x128xf32>
    %252 = arith.mulf %245, %227 : vector<2x128xf32>
    %253 = arith.mulf %240, %246 : vector<2x128xf32>
    %254 = arith.addf %252, %253 : vector<2x128xf32>
    %255 = math.tanh %254 : vector<2x128xf32>
    %256 = arith.mulf %251, %255 : vector<2x128xf32>
    %257 = vector.extract_strided_slice %11 {offsets = [9, 0, 0], sizes = [1, 2, 512], strides = [1, 1, 1]} : vector<16x2x512xf32> to vector<1x2x512xf32>
    %258 = vector.shape_cast %257 : vector<1x2x512xf32> to vector<2x512xf32>
    %259 = arith.truncf %256 : vector<2x128xf32> to vector<2x128xbf16>
    %cst_71 = arith.constant dense<0.000000e+00> : vector<2x512xf32>
    %260 = tpu.matmul %259, %2, %cst_71 {dimension_numbers = #tpu.dot_dimension_numbers<[1], [0], [0], [1], [0, 0, 1, 1], [], []>} : vector<2x128xbf16>, vector<128x512xbf16>, vector<2x512xf32> -> vector<2x512xf32>
    %261 = arith.addf %258, %260 : vector<2x512xf32>
    %262 = math.tanh %261 : vector<2x512xf32>
    %263 = vector.extract_strided_slice %262 {offsets = [0, 0], sizes = [2, 128], strides = [1, 1]} : vector<2x512xf32> to vector<2x128xf32>
    %cst_72 = arith.constant 5.000000e-01 : f32
    %264 = vector.broadcast %cst_72 : f32 to vector<2x128xf32>
    %265 = arith.mulf %264, %263 : vector<2x128xf32>
    %cst_73 = arith.constant 5.000000e-01 : f32
    %266 = vector.broadcast %cst_73 : f32 to vector<2x128xf32>
    %267 = arith.addf %265, %266 : vector<2x128xf32>
    %268 = vector.extract_strided_slice %262 {offsets = [0, 128], sizes = [2, 128], strides = [1, 1]} : vector<2x512xf32> to vector<2x128xf32>
    %cst_74 = arith.constant 5.000000e-01 : f32
    %269 = vector.broadcast %cst_74 : f32 to vector<2x128xf32>
    %270 = arith.mulf %269, %268 : vector<2x128xf32>
    %cst_75 = arith.constant 5.000000e-01 : f32
    %271 = vector.broadcast %cst_75 : f32 to vector<2x128xf32>
    %272 = arith.addf %270, %271 : vector<2x128xf32>
    %273 = vector.extract_strided_slice %262 {offsets = [0, 256], sizes = [2, 128], strides = [1, 1]} : vector<2x512xf32> to vector<2x128xf32>
    %274 = vector.extract_strided_slice %262 {offsets = [0, 384], sizes = [2, 128], strides = [1, 1]} : vector<2x512xf32> to vector<2x128xf32>
    %cst_76 = arith.constant 5.000000e-01 : f32
    %275 = vector.broadcast %cst_76 : f32 to vector<2x128xf32>
    %276 = arith.mulf %275, %274 : vector<2x128xf32>
    %cst_77 = arith.constant 5.000000e-01 : f32
    %277 = vector.broadcast %cst_77 : f32 to vector<2x128xf32>
    %278 = arith.addf %276, %277 : vector<2x128xf32>
    %279 = arith.mulf %272, %254 : vector<2x128xf32>
    %280 = arith.mulf %267, %273 : vector<2x128xf32>
    %281 = arith.addf %279, %280 : vector<2x128xf32>
    %282 = math.tanh %281 : vector<2x128xf32>
    %283 = arith.mulf %278, %282 : vector<2x128xf32>
    %284 = vector.extract_strided_slice %11 {offsets = [10, 0, 0], sizes = [1, 2, 512], strides = [1, 1, 1]} : vector<16x2x512xf32> to vector<1x2x512xf32>
    %285 = vector.shape_cast %284 : vector<1x2x512xf32> to vector<2x512xf32>
    %286 = arith.truncf %283 : vector<2x128xf32> to vector<2x128xbf16>
    %cst_78 = arith.constant dense<0.000000e+00> : vector<2x512xf32>
    %287 = tpu.matmul %286, %2, %cst_78 {dimension_numbers = #tpu.dot_dimension_numbers<[1], [0], [0], [1], [0, 0, 1, 1], [], []>} : vector<2x128xbf16>, vector<128x512xbf16>, vector<2x512xf32> -> vector<2x512xf32>
    %288 = arith.addf %285, %287 : vector<2x512xf32>
    %289 = math.tanh %288 : vector<2x512xf32>
    %290 = vector.extract_strided_slice %289 {offsets = [0, 0], sizes = [2, 128], strides = [1, 1]} : vector<2x512xf32> to vector<2x128xf32>
    %cst_79 = arith.constant 5.000000e-01 : f32
    %291 = vector.broadcast %cst_79 : f32 to vector<2x128xf32>
    %292 = arith.mulf %291, %290 : vector<2x128xf32>
    %cst_80 = arith.constant 5.000000e-01 : f32
    %293 = vector.broadcast %cst_80 : f32 to vector<2x128xf32>
    %294 = arith.addf %292, %293 : vector<2x128xf32>
    %295 = vector.extract_strided_slice %289 {offsets = [0, 128], sizes = [2, 128], strides = [1, 1]} : vector<2x512xf32> to vector<2x128xf32>
    %cst_81 = arith.constant 5.000000e-01 : f32
    %296 = vector.broadcast %cst_81 : f32 to vector<2x128xf32>
    %297 = arith.mulf %296, %295 : vector<2x128xf32>
    %cst_82 = arith.constant 5.000000e-01 : f32
    %298 = vector.broadcast %cst_82 : f32 to vector<2x128xf32>
    %299 = arith.addf %297, %298 : vector<2x128xf32>
    %300 = vector.extract_strided_slice %289 {offsets = [0, 256], sizes = [2, 128], strides = [1, 1]} : vector<2x512xf32> to vector<2x128xf32>
    %301 = vector.extract_strided_slice %289 {offsets = [0, 384], sizes = [2, 128], strides = [1, 1]} : vector<2x512xf32> to vector<2x128xf32>
    %cst_83 = arith.constant 5.000000e-01 : f32
    %302 = vector.broadcast %cst_83 : f32 to vector<2x128xf32>
    %303 = arith.mulf %302, %301 : vector<2x128xf32>
    %cst_84 = arith.constant 5.000000e-01 : f32
    %304 = vector.broadcast %cst_84 : f32 to vector<2x128xf32>
    %305 = arith.addf %303, %304 : vector<2x128xf32>
    %306 = arith.mulf %299, %281 : vector<2x128xf32>
    %307 = arith.mulf %294, %300 : vector<2x128xf32>
    %308 = arith.addf %306, %307 : vector<2x128xf32>
    %309 = math.tanh %308 : vector<2x128xf32>
    %310 = arith.mulf %305, %309 : vector<2x128xf32>
    %311 = vector.extract_strided_slice %11 {offsets = [11, 0, 0], sizes = [1, 2, 512], strides = [1, 1, 1]} : vector<16x2x512xf32> to vector<1x2x512xf32>
    %312 = vector.shape_cast %311 : vector<1x2x512xf32> to vector<2x512xf32>
    %313 = arith.truncf %310 : vector<2x128xf32> to vector<2x128xbf16>
    %cst_85 = arith.constant dense<0.000000e+00> : vector<2x512xf32>
    %314 = tpu.matmul %313, %2, %cst_85 {dimension_numbers = #tpu.dot_dimension_numbers<[1], [0], [0], [1], [0, 0, 1, 1], [], []>} : vector<2x128xbf16>, vector<128x512xbf16>, vector<2x512xf32> -> vector<2x512xf32>
    %315 = arith.addf %312, %314 : vector<2x512xf32>
    %316 = math.tanh %315 : vector<2x512xf32>
    %317 = vector.extract_strided_slice %316 {offsets = [0, 0], sizes = [2, 128], strides = [1, 1]} : vector<2x512xf32> to vector<2x128xf32>
    %cst_86 = arith.constant 5.000000e-01 : f32
    %318 = vector.broadcast %cst_86 : f32 to vector<2x128xf32>
    %319 = arith.mulf %318, %317 : vector<2x128xf32>
    %cst_87 = arith.constant 5.000000e-01 : f32
    %320 = vector.broadcast %cst_87 : f32 to vector<2x128xf32>
    %321 = arith.addf %319, %320 : vector<2x128xf32>
    %322 = vector.extract_strided_slice %316 {offsets = [0, 128], sizes = [2, 128], strides = [1, 1]} : vector<2x512xf32> to vector<2x128xf32>
    %cst_88 = arith.constant 5.000000e-01 : f32
    %323 = vector.broadcast %cst_88 : f32 to vector<2x128xf32>
    %324 = arith.mulf %323, %322 : vector<2x128xf32>
    %cst_89 = arith.constant 5.000000e-01 : f32
    %325 = vector.broadcast %cst_89 : f32 to vector<2x128xf32>
    %326 = arith.addf %324, %325 : vector<2x128xf32>
    %327 = vector.extract_strided_slice %316 {offsets = [0, 256], sizes = [2, 128], strides = [1, 1]} : vector<2x512xf32> to vector<2x128xf32>
    %328 = vector.extract_strided_slice %316 {offsets = [0, 384], sizes = [2, 128], strides = [1, 1]} : vector<2x512xf32> to vector<2x128xf32>
    %cst_90 = arith.constant 5.000000e-01 : f32
    %329 = vector.broadcast %cst_90 : f32 to vector<2x128xf32>
    %330 = arith.mulf %329, %328 : vector<2x128xf32>
    %cst_91 = arith.constant 5.000000e-01 : f32
    %331 = vector.broadcast %cst_91 : f32 to vector<2x128xf32>
    %332 = arith.addf %330, %331 : vector<2x128xf32>
    %333 = arith.mulf %326, %308 : vector<2x128xf32>
    %334 = arith.mulf %321, %327 : vector<2x128xf32>
    %335 = arith.addf %333, %334 : vector<2x128xf32>
    %336 = math.tanh %335 : vector<2x128xf32>
    %337 = arith.mulf %332, %336 : vector<2x128xf32>
    %338 = vector.extract_strided_slice %11 {offsets = [12, 0, 0], sizes = [1, 2, 512], strides = [1, 1, 1]} : vector<16x2x512xf32> to vector<1x2x512xf32>
    %339 = vector.shape_cast %338 : vector<1x2x512xf32> to vector<2x512xf32>
    %340 = arith.truncf %337 : vector<2x128xf32> to vector<2x128xbf16>
    %cst_92 = arith.constant dense<0.000000e+00> : vector<2x512xf32>
    %341 = tpu.matmul %340, %2, %cst_92 {dimension_numbers = #tpu.dot_dimension_numbers<[1], [0], [0], [1], [0, 0, 1, 1], [], []>} : vector<2x128xbf16>, vector<128x512xbf16>, vector<2x512xf32> -> vector<2x512xf32>
    %342 = arith.addf %339, %341 : vector<2x512xf32>
    %343 = math.tanh %342 : vector<2x512xf32>
    %344 = vector.extract_strided_slice %343 {offsets = [0, 0], sizes = [2, 128], strides = [1, 1]} : vector<2x512xf32> to vector<2x128xf32>
    %cst_93 = arith.constant 5.000000e-01 : f32
    %345 = vector.broadcast %cst_93 : f32 to vector<2x128xf32>
    %346 = arith.mulf %345, %344 : vector<2x128xf32>
    %cst_94 = arith.constant 5.000000e-01 : f32
    %347 = vector.broadcast %cst_94 : f32 to vector<2x128xf32>
    %348 = arith.addf %346, %347 : vector<2x128xf32>
    %349 = vector.extract_strided_slice %343 {offsets = [0, 128], sizes = [2, 128], strides = [1, 1]} : vector<2x512xf32> to vector<2x128xf32>
    %cst_95 = arith.constant 5.000000e-01 : f32
    %350 = vector.broadcast %cst_95 : f32 to vector<2x128xf32>
    %351 = arith.mulf %350, %349 : vector<2x128xf32>
    %cst_96 = arith.constant 5.000000e-01 : f32
    %352 = vector.broadcast %cst_96 : f32 to vector<2x128xf32>
    %353 = arith.addf %351, %352 : vector<2x128xf32>
    %354 = vector.extract_strided_slice %343 {offsets = [0, 256], sizes = [2, 128], strides = [1, 1]} : vector<2x512xf32> to vector<2x128xf32>
    %355 = vector.extract_strided_slice %343 {offsets = [0, 384], sizes = [2, 128], strides = [1, 1]} : vector<2x512xf32> to vector<2x128xf32>
    %cst_97 = arith.constant 5.000000e-01 : f32
    %356 = vector.broadcast %cst_97 : f32 to vector<2x128xf32>
    %357 = arith.mulf %356, %355 : vector<2x128xf32>
    %cst_98 = arith.constant 5.000000e-01 : f32
    %358 = vector.broadcast %cst_98 : f32 to vector<2x128xf32>
    %359 = arith.addf %357, %358 : vector<2x128xf32>
    %360 = arith.mulf %353, %335 : vector<2x128xf32>
    %361 = arith.mulf %348, %354 : vector<2x128xf32>
    %362 = arith.addf %360, %361 : vector<2x128xf32>
    %363 = math.tanh %362 : vector<2x128xf32>
    %364 = arith.mulf %359, %363 : vector<2x128xf32>
    %365 = vector.extract_strided_slice %11 {offsets = [13, 0, 0], sizes = [1, 2, 512], strides = [1, 1, 1]} : vector<16x2x512xf32> to vector<1x2x512xf32>
    %366 = vector.shape_cast %365 : vector<1x2x512xf32> to vector<2x512xf32>
    %367 = arith.truncf %364 : vector<2x128xf32> to vector<2x128xbf16>
    %cst_99 = arith.constant dense<0.000000e+00> : vector<2x512xf32>
    %368 = tpu.matmul %367, %2, %cst_99 {dimension_numbers = #tpu.dot_dimension_numbers<[1], [0], [0], [1], [0, 0, 1, 1], [], []>} : vector<2x128xbf16>, vector<128x512xbf16>, vector<2x512xf32> -> vector<2x512xf32>
    %369 = arith.addf %366, %368 : vector<2x512xf32>
    %370 = math.tanh %369 : vector<2x512xf32>
    %371 = vector.extract_strided_slice %370 {offsets = [0, 0], sizes = [2, 128], strides = [1, 1]} : vector<2x512xf32> to vector<2x128xf32>
    %cst_100 = arith.constant 5.000000e-01 : f32
    %372 = vector.broadcast %cst_100 : f32 to vector<2x128xf32>
    %373 = arith.mulf %372, %371 : vector<2x128xf32>
    %cst_101 = arith.constant 5.000000e-01 : f32
    %374 = vector.broadcast %cst_101 : f32 to vector<2x128xf32>
    %375 = arith.addf %373, %374 : vector<2x128xf32>
    %376 = vector.extract_strided_slice %370 {offsets = [0, 128], sizes = [2, 128], strides = [1, 1]} : vector<2x512xf32> to vector<2x128xf32>
    %cst_102 = arith.constant 5.000000e-01 : f32
    %377 = vector.broadcast %cst_102 : f32 to vector<2x128xf32>
    %378 = arith.mulf %377, %376 : vector<2x128xf32>
    %cst_103 = arith.constant 5.000000e-01 : f32
    %379 = vector.broadcast %cst_103 : f32 to vector<2x128xf32>
    %380 = arith.addf %378, %379 : vector<2x128xf32>
    %381 = vector.extract_strided_slice %370 {offsets = [0, 256], sizes = [2, 128], strides = [1, 1]} : vector<2x512xf32> to vector<2x128xf32>
    %382 = vector.extract_strided_slice %370 {offsets = [0, 384], sizes = [2, 128], strides = [1, 1]} : vector<2x512xf32> to vector<2x128xf32>
    %cst_104 = arith.constant 5.000000e-01 : f32
    %383 = vector.broadcast %cst_104 : f32 to vector<2x128xf32>
    %384 = arith.mulf %383, %382 : vector<2x128xf32>
    %cst_105 = arith.constant 5.000000e-01 : f32
    %385 = vector.broadcast %cst_105 : f32 to vector<2x128xf32>
    %386 = arith.addf %384, %385 : vector<2x128xf32>
    %387 = arith.mulf %380, %362 : vector<2x128xf32>
    %388 = arith.mulf %375, %381 : vector<2x128xf32>
    %389 = arith.addf %387, %388 : vector<2x128xf32>
    %390 = math.tanh %389 : vector<2x128xf32>
    %391 = arith.mulf %386, %390 : vector<2x128xf32>
    %392 = vector.extract_strided_slice %11 {offsets = [14, 0, 0], sizes = [1, 2, 512], strides = [1, 1, 1]} : vector<16x2x512xf32> to vector<1x2x512xf32>
    %393 = vector.shape_cast %392 : vector<1x2x512xf32> to vector<2x512xf32>
    %394 = arith.truncf %391 : vector<2x128xf32> to vector<2x128xbf16>
    %cst_106 = arith.constant dense<0.000000e+00> : vector<2x512xf32>
    %395 = tpu.matmul %394, %2, %cst_106 {dimension_numbers = #tpu.dot_dimension_numbers<[1], [0], [0], [1], [0, 0, 1, 1], [], []>} : vector<2x128xbf16>, vector<128x512xbf16>, vector<2x512xf32> -> vector<2x512xf32>
    %396 = arith.addf %393, %395 : vector<2x512xf32>
    %397 = math.tanh %396 : vector<2x512xf32>
    %398 = vector.extract_strided_slice %397 {offsets = [0, 0], sizes = [2, 128], strides = [1, 1]} : vector<2x512xf32> to vector<2x128xf32>
    %cst_107 = arith.constant 5.000000e-01 : f32
    %399 = vector.broadcast %cst_107 : f32 to vector<2x128xf32>
    %400 = arith.mulf %399, %398 : vector<2x128xf32>
    %cst_108 = arith.constant 5.000000e-01 : f32
    %401 = vector.broadcast %cst_108 : f32 to vector<2x128xf32>
    %402 = arith.addf %400, %401 : vector<2x128xf32>
    %403 = vector.extract_strided_slice %397 {offsets = [0, 128], sizes = [2, 128], strides = [1, 1]} : vector<2x512xf32> to vector<2x128xf32>
    %cst_109 = arith.constant 5.000000e-01 : f32
    %404 = vector.broadcast %cst_109 : f32 to vector<2x128xf32>
    %405 = arith.mulf %404, %403 : vector<2x128xf32>
    %cst_110 = arith.constant 5.000000e-01 : f32
    %406 = vector.broadcast %cst_110 : f32 to vector<2x128xf32>
    %407 = arith.addf %405, %406 : vector<2x128xf32>
    %408 = vector.extract_strided_slice %397 {offsets = [0, 256], sizes = [2, 128], strides = [1, 1]} : vector<2x512xf32> to vector<2x128xf32>
    %409 = vector.extract_strided_slice %397 {offsets = [0, 384], sizes = [2, 128], strides = [1, 1]} : vector<2x512xf32> to vector<2x128xf32>
    %cst_111 = arith.constant 5.000000e-01 : f32
    %410 = vector.broadcast %cst_111 : f32 to vector<2x128xf32>
    %411 = arith.mulf %410, %409 : vector<2x128xf32>
    %cst_112 = arith.constant 5.000000e-01 : f32
    %412 = vector.broadcast %cst_112 : f32 to vector<2x128xf32>
    %413 = arith.addf %411, %412 : vector<2x128xf32>
    %414 = arith.mulf %407, %389 : vector<2x128xf32>
    %415 = arith.mulf %402, %408 : vector<2x128xf32>
    %416 = arith.addf %414, %415 : vector<2x128xf32>
    %417 = math.tanh %416 : vector<2x128xf32>
    %418 = arith.mulf %413, %417 : vector<2x128xf32>
    %419 = vector.extract_strided_slice %11 {offsets = [15, 0, 0], sizes = [1, 2, 512], strides = [1, 1, 1]} : vector<16x2x512xf32> to vector<1x2x512xf32>
    %420 = vector.shape_cast %419 : vector<1x2x512xf32> to vector<2x512xf32>
    %421 = arith.truncf %418 : vector<2x128xf32> to vector<2x128xbf16>
    %cst_113 = arith.constant dense<0.000000e+00> : vector<2x512xf32>
    %422 = tpu.matmul %421, %2, %cst_113 {dimension_numbers = #tpu.dot_dimension_numbers<[1], [0], [0], [1], [0, 0, 1, 1], [], []>} : vector<2x128xbf16>, vector<128x512xbf16>, vector<2x512xf32> -> vector<2x512xf32>
    %423 = arith.addf %420, %422 : vector<2x512xf32>
    %424 = math.tanh %423 : vector<2x512xf32>
    %425 = vector.extract_strided_slice %424 {offsets = [0, 0], sizes = [2, 128], strides = [1, 1]} : vector<2x512xf32> to vector<2x128xf32>
    %cst_114 = arith.constant 5.000000e-01 : f32
    %426 = vector.broadcast %cst_114 : f32 to vector<2x128xf32>
    %427 = arith.mulf %426, %425 : vector<2x128xf32>
    %cst_115 = arith.constant 5.000000e-01 : f32
    %428 = vector.broadcast %cst_115 : f32 to vector<2x128xf32>
    %429 = arith.addf %427, %428 : vector<2x128xf32>
    %430 = vector.extract_strided_slice %424 {offsets = [0, 128], sizes = [2, 128], strides = [1, 1]} : vector<2x512xf32> to vector<2x128xf32>
    %cst_116 = arith.constant 5.000000e-01 : f32
    %431 = vector.broadcast %cst_116 : f32 to vector<2x128xf32>
    %432 = arith.mulf %431, %430 : vector<2x128xf32>
    %cst_117 = arith.constant 5.000000e-01 : f32
    %433 = vector.broadcast %cst_117 : f32 to vector<2x128xf32>
    %434 = arith.addf %432, %433 : vector<2x128xf32>
    %435 = vector.extract_strided_slice %424 {offsets = [0, 256], sizes = [2, 128], strides = [1, 1]} : vector<2x512xf32> to vector<2x128xf32>
    %436 = vector.extract_strided_slice %424 {offsets = [0, 384], sizes = [2, 128], strides = [1, 1]} : vector<2x512xf32> to vector<2x128xf32>
    %cst_118 = arith.constant 5.000000e-01 : f32
    %437 = vector.broadcast %cst_118 : f32 to vector<2x128xf32>
    %438 = arith.mulf %437, %436 : vector<2x128xf32>
    %cst_119 = arith.constant 5.000000e-01 : f32
    %439 = vector.broadcast %cst_119 : f32 to vector<2x128xf32>
    %440 = arith.addf %438, %439 : vector<2x128xf32>
    %441 = arith.mulf %434, %416 : vector<2x128xf32>
    %442 = arith.mulf %429, %435 : vector<2x128xf32>
    %443 = arith.addf %441, %442 : vector<2x128xf32>
    %444 = math.tanh %443 : vector<2x128xf32>
    %445 = arith.mulf %440, %444 : vector<2x128xf32>
    %c0_120 = arith.constant 0 : index
    %c0_121 = arith.constant 0 : index
    %446 = vector.load %arg4[%c0_120, %c0_121] : memref<128x5xf32, #tpu.memory_space<vmem>>, vector<128x5xf32>
    %cst_122 = arith.constant dense<0.000000e+00> : vector<2x5xf32>
    %447 = tpu.matmul %445, %446, %cst_122 {dimension_numbers = #tpu.dot_dimension_numbers<[1], [0], [0], [1], [0, 0, 1, 1], [], []>} : vector<2x128xf32>, vector<128x5xf32>, vector<2x5xf32> -> vector<2x5xf32>
    %c0_123 = arith.constant 0 : index
    %c0_124 = arith.constant 0 : index
    %448 = vector.load %arg5[%c0_123, %c0_124] : memref<1x5xf32, #tpu.memory_space<vmem>>, vector<1x5xf32>
    %449 = vector.broadcast %448 : vector<1x5xf32> to vector<2x5xf32>
    %450 = arith.addf %447, %449 : vector<2x5xf32>
    %cst_125 = arith.constant dense<0xFF800000> : vector<2xf32>
    %451 = vector.multi_reduction <maximumf>, %450, %cst_125 [1] : vector<2x5xf32> to vector<2xf32>
    %452 = vector.shape_cast %451 : vector<2xf32> to vector<2x1xf32>
    %453 = vector.broadcast %452 : vector<2x1xf32> to vector<2x5xf32>
    %454 = arith.subf %450, %453 : vector<2x5xf32>
    %455 = math.exp %454 : vector<2x5xf32>
    %cst_126 = arith.constant dense<0.000000e+00> : vector<2xf32>
    %456 = vector.multi_reduction <add>, %455, %cst_126 [1] : vector<2x5xf32> to vector<2xf32>
    %457 = vector.shape_cast %456 : vector<2xf32> to vector<2x1xf32>
    %458 = vector.broadcast %457 : vector<2x1xf32> to vector<2x5xf32>
    %459 = arith.divf %455, %458 : vector<2x5xf32>
    %c0_127 = arith.constant 0 : index
    %c0_128 = arith.constant 0 : index
    %460 = vector.load %arg6[%c0_127, %c0_128] : memref<2x5xf32, #tpu.memory_space<vmem>>, vector<2x5xf32>
    tpu.vector_store %arg6[%c0_127, %c0_128], %459 {strides = array<i32>} : memref<2x5xf32, #tpu.memory_space<vmem>>, vector<2x5xf32>,
    return
  }
}

</mosaic_0001>

<llo_original>
// kernel: lstm_forward.1
$region0: #{lstm_forward.1}
  #allocation0 [shape = 'u32[]', space=smem, size = 0x4, offset = 0x4, fixed_abs, tag = 'smem constant byte address 0x4 - core index']
  #allocation1 [shape = 'u32[144,128]{1,0:T(1,128)}', space=vmem, size = 0x12000, scoped, tag = 'internal scratch']
  %s0 = inlined_call_operand.vmem [shape: f32[16,2], index: 0, kind: input, shape index: {}]
  %s1 = inlined_call_operand.vmem [shape: f32[1,512], index: 1, kind: input, shape index: {}]
  %s2 = inlined_call_operand.hbm [shape: bf16[128,512], index: 2, kind: input, shape index: {}]
  %s3 = inlined_call_operand.vmem [shape: f32[1,512], index: 3, kind: input, shape index: {}]
  %s4 = inlined_call_operand.vmem [shape: f32[128,5], index: 4, kind: input, shape index: {}]
  %s5 = inlined_call_operand.vmem [shape: f32[1,5], index: 5, kind: input, shape index: {}]
  %s6 = inlined_call_operand.hbm [shape: f32[2,5], index: 6, kind: output, shape index: {}]
  %s7 = sld [smem:[#allocation0]]
  $region38: #{lstm_forward.1} parent=0
    _
  %s9 = ssub.s32 1, %s7
  %s10 = scalar_select 0, %s9, %s7
  $region1: #{lstm_forward.1} parent=0
    #allocation2 [shape = 'u8[131072]{0}', space=vmem, size = 0x20000, scoped, tag = 'input window, operand 2, single buffered']
    #allocation3 [shape = 's32[1]{0}', space=sflag, size = 0x4, scoped, tag = 'scoped memory for lstm_forward.1']
    #allocation4 [shape = 's32[1]{0}', space=sflag, size = 0x4, scoped, tag = 'scoped memory for lstm_forward.1']
    #allocation5 [shape = 'u8[1024]{0}', space=vmem, size = 0x400, scoped, tag = 'output window, operand 0, single buffered']
    %11 = vsyncpa [#allocation3], 0
    %12 = vsyncpa [#allocation4], 0
    // Predicated region
    $region2: #{lstm_forward.1} parent=1 // pred_check
      _
    $region3: #{lstm_forward.1} parent=1 // pred_check_branch
      %14 = sbr.rel (0) target = $region5
    $region4: #{lstm_forward.1} parent=1 // pred_region
      _
    $region5: #{lstm_forward.1} parent=1 // pred_fallthru
      _
    // Predicated region
    $region6: #{lstm_forward.1} parent=1 // pred_check
      _
    $region7: #{lstm_forward.1} parent=1 // pred_check_branch
      %16 = sbr.rel (0) target = $region9
    $region8: #{lstm_forward.1} parent=1 // pred_region
      _
    $region9: #{lstm_forward.1} parent=1 // pred_fallthru
      _
    // Predicated region
    $region10: #{lstm_forward.1} parent=1 // pred_check
      _
    $region11: #{lstm_forward.1} parent=1 // pred_check_branch
      %18 = sbr.rel (0) target = $region13
    $region12: #{lstm_forward.1} parent=1 // pred_region
      %s20 = ssub.s32 4096, 4096
      %21 = vsyncadd [#allocation3], %s20
      %s22 = sshll.u32 [#allocation2], 4
      %s23 = int_to_ptr.vmem [resolvable:$true] %s22
      %28 = dma.hbm_to_vmem [thread:$0]  %s2, 4096, %s23, [#allocation3], 256, 256, 16
    $region13: #{lstm_forward.1} parent=1 // pred_fallthru
      _
    // Predicated region
    $region14: #{lstm_forward.1} parent=1 // pred_check
      _
    $region15: #{lstm_forward.1} parent=1 // pred_check_branch
      %30 = sbr.rel (0) target = $region17
    $region16: #{lstm_forward.1} parent=1 // pred_region
      _
    $region17: #{lstm_forward.1} parent=1 // pred_fallthru
      _
    // Predicated region
    $region18: #{lstm_forward.1} parent=1 // pred_check
      _
    $region19: #{lstm_forward.1} parent=1 // pred_check_branch
      %32 = sbr.rel (0) target = $region21
    $region20: #{lstm_forward.1} parent=1 // pred_region
      _
    $region21: #{lstm_forward.1} parent=1 // pred_fallthru
      _
    // Predicated region
    $region22: #{lstm_forward.1} parent=1 // pred_check
      _
    $region23: #{lstm_forward.1} parent=1 // pred_check_branch
      %34 = sbr.rel (0) target = $region25
    $region24: #{lstm_forward.1} parent=1 // pred_region
      _
    $region25: #{lstm_forward.1} parent=1 // pred_fallthru
      _
    // Predicated region
    $region26: #{lstm_forward.1} parent=1 // pred_check
      _
    $region27: #{lstm_forward.1} parent=1 // pred_check_branch
      %36 = sbr.rel (0) target = $region29
    $region28: #{lstm_forward.1} parent=1 // pred_region
      %37 = dma.done [#allocation3], 4096
    $region29: #{lstm_forward.1} parent=1 // pred_fallthru
      _
    %v39 = vld [vmem:[%s0] sm:$0xff]
    %v40 = vld [vmem:[%s0 + $0x8] sm:$0xff]
    %v41 = vld [vmem:[%s1] sm:$0xf]
    %v42 = vld [vmem:[#allocation2] sm:$0xff]
    %v43 = vld [vmem:[#allocation2 + $0x8] sm:$0xff]
    %v44 = vld [vmem:[#allocation2 + $0x10] sm:$0xff]
    %v45 = vld [vmem:[#allocation2 + $0x18] sm:$0xff]
    %v46 = vld [vmem:[#allocation2 + $0x20] sm:$0xff]
    %v47 = vld [vmem:[#allocation2 + $0x28] sm:$0xff]
    %v48 = vld [vmem:[#allocation2 + $0x30] sm:$0xff]
    %v49 = vld [vmem:[#allocation2 + $0x38] sm:$0xff]
    %v50 = vld [vmem:[#allocation2 + $0x40] sm:$0xff]
    %v51 = vld [vmem:[#allocation2 + $0x48] sm:$0xff]
    %v52 = vld [vmem:[#allocation2 + $0x50] sm:$0xff]
    %v53 = vld [vmem:[#allocation2 + $0x58] sm:$0xff]
    %v54 = vld [vmem:[#allocation2 + $0x60] sm:$0xff]
    %v55 = vld [vmem:[#allocation2 + $0x68] sm:$0xff]
    %v56 = vld [vmem:[#allocation2 + $0x70] sm:$0xff]
    %v57 = vld [vmem:[#allocation2 + $0x78] sm:$0xff]
    %v58 = vld [vmem:[#allocation2 + $0x80] sm:$0xff]
    %v59 = vld [vmem:[#allocation2 + $0x88] sm:$0xff]
    %v60 = vld [vmem:[#allocation2 + $0x90] sm:$0xff]
    %v61 = vld [vmem:[#allocation2 + $0x98] sm:$0xff]
    %v62 = vld [vmem:[#allocation2 + $0xa0] sm:$0xff]
    %v63 = vld [vmem:[#allocation2 + $0xa8] sm:$0xff]
    %v64 = vld [vmem:[#allocation2 + $0xb0] sm:$0xff]
    %v65 = vld [vmem:[#allocation2 + $0xb8] sm:$0xff]
    %v66 = vld [vmem:[#allocation2 + $0xc0] sm:$0xff]
    %v67 = vld [vmem:[#allocation2 + $0xc8] sm:$0xff]
    %v68 = vld [vmem:[#allocation2 + $0xd0] sm:$0xff]
    %v69 = vld [vmem:[#allocation2 + $0xd8] sm:$0xff]
    %v70 = vld [vmem:[#allocation2 + $0xe0] sm:$0xff]
    %v71 = vld [vmem:[#allocation2 + $0xe8] sm:$0xff]
    %v72 = vld [vmem:[#allocation2 + $0xf0] sm:$0xff]
    %v73 = vld [vmem:[#allocation2 + $0xf8] sm:$0xff]
    %v74 = vld [vmem:[%s3] sm:$0xf]
    %v75 = vlaneseq
    %v76 = vshrl.u32 %v75, 7
    %v77 = vsub.s32 0, %v76
    %v78 = vrot.slane %v39, %v77
    %80 = vbcast.lane.b32.xlu0 %v78, 256
    %v81 = vpop.permute.xlu0 %80
    %v82 = vlaneseq
    %v83 = vshrl.u32 %v82, 7
    %v84 = vsub.s32 1, %v83
    %v85 = vrot.slane %v39, %v84
    %87 = vbcast.lane.b32.xlu0 %v85, 256
    %v88 = vpop.permute.xlu0 %87
    %v89 = vlaneseq
    %v90 = vshrl.u32 %v89, 7
    %v91 = vsub.s32 2, %v90
    %v92 = vrot.slane %v39, %v91
    %94 = vbcast.lane.b32.xlu0 %v92, 256
    %v95 = vpop.permute.xlu0 %94
    %v96 = vlaneseq
    %v97 = vshrl.u32 %v96, 7
    %v98 = vsub.s32 3, %v97
    %v99 = vrot.slane %v39, %v98
    %101 = vbcast.lane.b32.xlu0 %v99, 256
    %v102 = vpop.permute.xlu0 %101
    %v103 = vlaneseq
    %v104 = vshrl.u32 %v103, 7
    %v105 = vsub.s32 4, %v104
    %v106 = vrot.slane %v39, %v105
    %108 = vbcast.lane.b32.xlu0 %v106, 256
    %v109 = vpop.permute.xlu0 %108
    %v110 = vlaneseq
    %v111 = vshrl.u32 %v110, 7
    %v112 = vsub.s32 5, %v111
    %v113 = vrot.slane %v39, %v112
    %115 = vbcast.lane.b32.xlu0 %v113, 256
    %v116 = vpop.permute.xlu0 %115
    %v117 = vlaneseq
    %v118 = vshrl.u32 %v117, 7
    %v119 = vsub.s32 6, %v118
    %v120 = vrot.slane %v39, %v119
    %122 = vbcast.lane.b32.xlu0 %v120, 256
    %v123 = vpop.permute.xlu0 %122
    %v124 = vlaneseq
    %v125 = vshrl.u32 %v124, 7
    %v126 = vsub.s32 7, %v125
    %v127 = vrot.slane %v39, %v126
    %129 = vbcast.lane.b32.xlu0 %v127, 256
    %v130 = vpop.permute.xlu0 %129
    %v131 = vlaneseq
    %v132 = vshrl.u32 %v131, 7
    %v133 = vsub.s32 0, %v132
    %v134 = vrot.slane %v40, %v133
    %136 = vbcast.lane.b32.xlu0 %v134, 256
    %v137 = vpop.permute.xlu0 %136
    %v138 = vlaneseq
    %v139 = vshrl.u32 %v138, 7
    %v140 = vsub.s32 1, %v139
    %v141 = vrot.slane %v40, %v140
    %143 = vbcast.lane.b32.xlu0 %v141, 256
    %v144 = vpop.permute.xlu0 %143
    %v145 = vlaneseq
    %v146 = vshrl.u32 %v145, 7
    %v147 = vsub.s32 2, %v146
    %v148 = vrot.slane %v40, %v147
    %150 = vbcast.lane.b32.xlu0 %v148, 256
    %v151 = vpop.permute.xlu0 %150
    %v152 = vlaneseq
    %v153 = vshrl.u32 %v152, 7
    %v154 = vsub.s32 3, %v153
    %v155 = vrot.slane %v40, %v154
    %157 = vbcast.lane.b32.xlu0 %v155, 256
    %v158 = vpop.permute.xlu0 %157
    %v159 = vlaneseq
    %v160 = vshrl.u32 %v159, 7
    %v161 = vsub.s32 4, %v160
    %v162 = vrot.slane %v40, %v161
    %164 = vbcast.lane.b32.xlu0 %v162, 256
    %v165 = vpop.permute.xlu0 %164
    %v166 = vlaneseq
    %v167 = vshrl.u32 %v166, 7
    %v168 = vsub.s32 5, %v167
    %v169 = vrot.slane %v40, %v168
    %171 = vbcast.lane.b32.xlu0 %v169, 256
    %v172 = vpop.permute.xlu0 %171
    %v173 = vlaneseq
    %v174 = vshrl.u32 %v173, 7
    %v175 = vsub.s32 6, %v174
    %v176 = vrot.slane %v40, %v175
    %178 = vbcast.lane.b32.xlu0 %v176, 256
    %v179 = vpop.permute.xlu0 %178
    %v180 = vlaneseq
    %v181 = vshrl.u32 %v180, 7
    %v182 = vsub.s32 7, %v181
    %v183 = vrot.slane %v40, %v182
    %185 = vbcast.lane.b32.xlu0 %v183, 256
    %v186 = vpop.permute.xlu0 %185
    %v188 = vlaneseq
    %v189 = vshrl.u32 %v188, 7
    %v190 = vsub.s32 0, %v189
    %v191 = vrot.slane %v41, %v190
    %v192 = vlaneseq
    %v193 = vshrl.u32 %v192, 7
    %v194 = vsub.s32 1, %v193
    %v195 = vrot.slane %v41, %v194
    %v196 = vlaneseq
    %v197 = vshrl.u32 %v196, 7
    %v198 = vsub.s32 2, %v197
    %v199 = vrot.slane %v41, %v198
    %v200 = vlaneseq
    %v201 = vshrl.u32 %v200, 7
    %v202 = vsub.s32 3, %v201
    %v203 = vrot.slane %v41, %v202
    %v208 = vmul.f32 %v81, %v191
    %v209 = vmul.f32 %v81, %v195
    %v210 = vmul.f32 %v81, %v199
    %v211 = vmul.f32 %v81, %v203
    %v212 = vmul.f32 %v88, %v191
    %v213 = vmul.f32 %v88, %v195
    %v214 = vmul.f32 %v88, %v199
    %v215 = vmul.f32 %v88, %v203
    %v216 = vmul.f32 %v95, %v191
    %v217 = vmul.f32 %v95, %v195
    %v218 = vmul.f32 %v95, %v199
    %v219 = vmul.f32 %v95, %v203
    %v220 = vmul.f32 %v102, %v191
    %v221 = vmul.f32 %v102, %v195
    %v222 = vmul.f32 %v102, %v199
    %v223 = vmul.f32 %v102, %v203
    %v224 = vmul.f32 %v109, %v191
    %v225 = vmul.f32 %v109, %v195
    %v226 = vmul.f32 %v109, %v199
    %v227 = vmul.f32 %v109, %v203
    %v228 = vmul.f32 %v116, %v191
    %v229 = vmul.f32 %v116, %v195
    %v230 = vmul.f32 %v116, %v199
    %v231 = vmul.f32 %v116, %v203
    %v232 = vmul.f32 %v123, %v191
    %v233 = vmul.f32 %v123, %v195
    %v234 = vmul.f32 %v123, %v199
    %v235 = vmul.f32 %v123, %v203
    %v236 = vmul.f32 %v130, %v191
    %v237 = vmul.f32 %v130, %v195
    %v238 = vmul.f32 %v130, %v199
    %v239 = vmul.f32 %v130, %v203
    %v240 = vmul.f32 %v137, %v191
    %v241 = vmul.f32 %v137, %v195
    %v242 = vmul.f32 %v137, %v199
    %v243 = vmul.f32 %v137, %v203
    %v244 = vmul.f32 %v144, %v191
    %v245 = vmul.f32 %v144, %v195
    %v246 = vmul.f32 %v144, %v199
    %v247 = vmul.f32 %v144, %v203
    %v248 = vmul.f32 %v151, %v191
    %v249 = vmul.f32 %v151, %v195
    %v250 = vmul.f32 %v151, %v199
    %v251 = vmul.f32 %v151, %v203
    %v252 = vmul.f32 %v158, %v191
    %v253 = vmul.f32 %v158, %v195
    %v254 = vmul.f32 %v158, %v199
    %v255 = vmul.f32 %v158, %v203
    %v256 = vmul.f32 %v165, %v191
    %v257 = vmul.f32 %v165, %v195
    %v258 = vmul.f32 %v165, %v199
    %v259 = vmul.f32 %v165, %v203
    %v260 = vmul.f32 %v172, %v191
    %v261 = vmul.f32 %v172, %v195
    %v262 = vmul.f32 %v172, %v199
    %v263 = vmul.f32 %v172, %v203
    %v264 = vmul.f32 %v179, %v191
    %v265 = vmul.f32 %v179, %v195
    %v266 = vmul.f32 %v179, %v199
    %v267 = vmul.f32 %v179, %v203
    %v268 = vmul.f32 %v186, %v191
    %v269 = vmul.f32 %v186, %v195
    %v270 = vmul.f32 %v186, %v199
    %v271 = vmul.f32 %v186, %v203
    %v273 = vlaneseq
    %v274 = vshrl.u32 %v273, 7
    %v275 = vsub.s32 0, %v274
    %v276 = vrot.slane %v74, %v275
    %v277 = vlaneseq
    %v278 = vshrl.u32 %v277, 7
    %v279 = vsub.s32 1, %v278
    %v280 = vrot.slane %v74, %v279
    %v281 = vlaneseq
    %v282 = vshrl.u32 %v281, 7
    %v283 = vsub.s32 2, %v282
    %v284 = vrot.slane %v74, %v283
    %v285 = vlaneseq
    %v286 = vshrl.u32 %v285, 7
    %v287 = vsub.s32 3, %v286
    %v288 = vrot.slane %v74, %v287
    %v293 = vadd.f32 %v208, %v276
    %v294 = vadd.f32 %v209, %v280
    %v295 = vadd.f32 %v210, %v284
    %v296 = vadd.f32 %v211, %v288
    %v297 = vadd.f32 %v212, %v276
    %v298 = vadd.f32 %v213, %v280
    %v299 = vadd.f32 %v214, %v284
    %v300 = vadd.f32 %v215, %v288
    %v301 = vadd.f32 %v216, %v276
    %v302 = vadd.f32 %v217, %v280
    %v303 = vadd.f32 %v218, %v284
    %v304 = vadd.f32 %v219, %v288
    %v305 = vadd.f32 %v220, %v276
    %v306 = vadd.f32 %v221, %v280
    %v307 = vadd.f32 %v222, %v284
    %v308 = vadd.f32 %v223, %v288
    %v309 = vadd.f32 %v224, %v276
    %v310 = vadd.f32 %v225, %v280
    %v311 = vadd.f32 %v226, %v284
    %v312 = vadd.f32 %v227, %v288
    %v313 = vadd.f32 %v228, %v276
    %v314 = vadd.f32 %v229, %v280
    %v315 = vadd.f32 %v230, %v284
    %v316 = vadd.f32 %v231, %v288
    %v317 = vadd.f32 %v232, %v276
    %v318 = vadd.f32 %v233, %v280
    %v319 = vadd.f32 %v234, %v284
    %v320 = vadd.f32 %v235, %v288
    %v321 = vadd.f32 %v236, %v276
    %v322 = vadd.f32 %v237, %v280
    %v323 = vadd.f32 %v238, %v284
    %v324 = vadd.f32 %v239, %v288
    %v325 = vadd.f32 %v240, %v276
    %v326 = vadd.f32 %v241, %v280
    %v327 = vadd.f32 %v242, %v284
    %v328 = vadd.f32 %v243, %v288
    %v329 = vadd.f32 %v244, %v276
    %v330 = vadd.f32 %v245, %v280
    %v331 = vadd.f32 %v246, %v284
    %v332 = vadd.f32 %v247, %v288
    %v333 = vadd.f32 %v248, %v276
    %v334 = vadd.f32 %v249, %v280
    %v335 = vadd.f32 %v250, %v284
    %v336 = vadd.f32 %v251, %v288
    %v337 = vadd.f32 %v252, %v276
    %v338 = vadd.f32 %v253, %v280
    %v339 = vadd.f32 %v254, %v284
    %v340 = vadd.f32 %v255, %v288
    %v341 = vadd.f32 %v256, %v276
    %v342 = vadd.f32 %v257, %v280
    %v343 = vadd.f32 %v258, %v284
    %v344 = vadd.f32 %v259, %v288
    %v345 = vadd.f32 %v260, %v276
    %v346 = vadd.f32 %v261, %v280
    %v347 = vadd.f32 %v262, %v284
    %v348 = vadd.f32 %v263, %v288
    %v349 = vadd.f32 %v264, %v276
    %v350 = vadd.f32 %v265, %v280
    %v351 = vadd.f32 %v266, %v284
    %v352 = vadd.f32 %v267, %v288
    %v353 = vadd.f32 %v268, %v276
    %v354 = vadd.f32 %v269, %v280
    %v355 = vadd.f32 %v270, %v284
    %v356 = vadd.f32 %v271, %v288
    %v389 = vunpack.c.l.b16 %v42
    %v390 = vunpack.c.h.b16 %v42
    %v391 = vunpack.c.l.b16 %v43
    %v392 = vunpack.c.h.b16 %v43
    %v393 = vunpack.c.l.b16 %v44
    %v394 = vunpack.c.h.b16 %v44
    %v395 = vunpack.c.l.b16 %v45
    %v396 = vunpack.c.h.b16 %v45
    %v397 = vunpack.c.l.b16 %v46
    %v398 = vunpack.c.h.b16 %v46
    %v399 = vunpack.c.l.b16 %v47
    %v400 = vunpack.c.h.b16 %v47
    %v401 = vunpack.c.l.b16 %v48
    %v402 = vunpack.c.h.b16 %v48
    %v403 = vunpack.c.l.b16 %v49
    %v404 = vunpack.c.h.b16 %v49
    %v405 = vunpack.c.l.b16 %v50
    %v406 = vunpack.c.h.b16 %v50
    %v407 = vunpack.c.l.b16 %v51
    %v408 = vunpack.c.h.b16 %v51
    %v409 = vunpack.c.l.b16 %v52
    %v410 = vunpack.c.h.b16 %v52
    %v411 = vunpack.c.l.b16 %v53
    %v412 = vunpack.c.h.b16 %v53
    %v413 = vunpack.c.l.b16 %v54
    %v414 = vunpack.c.h.b16 %v54
    %v415 = vunpack.c.l.b16 %v55
    %v416 = vunpack.c.h.b16 %v55
    %v417 = vunpack.c.l.b16 %v56
    %v418 = vunpack.c.h.b16 %v56
    %v419 = vunpack.c.l.b16 %v57
    %v420 = vunpack.c.h.b16 %v57
    %v421 = vunpack.c.l.b16 %v58
    %v422 = vunpack.c.h.b16 %v58
    %v423 = vunpack.c.l.b16 %v59
    %v424 = vunpack.c.h.b16 %v59
    %v425 = vunpack.c.l.b16 %v60
    %v426 = vunpack.c.h.b16 %v60
    %v427 = vunpack.c.l.b16 %v61
    %v428 = vunpack.c.h.b16 %v61
    %v429 = vunpack.c.l.b16 %v62
    %v430 = vunpack.c.h.b16 %v62
    %v431 = vunpack.c.l.b16 %v63
    %v432 = vunpack.c.h.b16 %v63
    %v433 = vunpack.c.l.b16 %v64
    %v434 = vunpack.c.h.b16 %v64
    %v435 = vunpack.c.l.b16 %v65
    %v436 = vunpack.c.h.b16 %v65
    %v437 = vunpack.c.l.b16 %v66
    %v438 = vunpack.c.h.b16 %v66
    %v439 = vunpack.c.l.b16 %v67
    %v440 = vunpack.c.h.b16 %v67
    %v441 = vunpack.c.l.b16 %v68
    %v442 = vunpack.c.h.b16 %v68
    %v443 = vunpack.c.l.b16 %v69
    %v444 = vunpack.c.h.b16 %v69
    %v445 = vunpack.c.l.b16 %v70
    %v446 = vunpack.c.h.b16 %v70
    %v447 = vunpack.c.l.b16 %v71
    %v448 = vunpack.c.h.b16 %v71
    %v449 = vunpack.c.l.b16 %v72
    %v450 = vunpack.c.h.b16 %v72
    %v451 = vunpack.c.l.b16 %v73
    %v452 = vunpack.c.h.b16 %v73
    %v453 = vpack.c.b16 %v393, %v389
    %v454 = vpack.c.b16 %v394, %v390
    %v455 = vpack.c.b16 %v395, %v391
    %v456 = vpack.c.b16 %v396, %v392
    %v457 = vpack.c.b16 %v401, %v397
    %v458 = vpack.c.b16 %v402, %v398
    %v459 = vpack.c.b16 %v403, %v399
    %v460 = vpack.c.b16 %v404, %v400
    %v461 = vpack.c.b16 %v409, %v405
    %v462 = vpack.c.b16 %v410, %v406
    %v463 = vpack.c.b16 %v411, %v407
    %v464 = vpack.c.b16 %v412, %v408
    %v465 = vpack.c.b16 %v417, %v413
    %v466 = vpack.c.b16 %v418, %v414
    %v467 = vpack.c.b16 %v419, %v415
    %v468 = vpack.c.b16 %v420, %v416
    %v469 = vpack.c.b16 %v425, %v421
    %v470 = vpack.c.b16 %v426, %v422
    %v471 = vpack.c.b16 %v427, %v423
    %v472 = vpack.c.b16 %v428, %v424
    %v473 = vpack.c.b16 %v433, %v429
    %v474 = vpack.c.b16 %v434, %v430
    %v475 = vpack.c.b16 %v435, %v431
    %v476 = vpack.c.b16 %v436, %v432
    %v477 = vpack.c.b16 %v441, %v437
    %v478 = vpack.c.b16 %v442, %v438
    %v479 = vpack.c.b16 %v443, %v439
    %v480 = vpack.c.b16 %v444, %v440
    %v481 = vpack.c.b16 %v449, %v445
    %v482 = vpack.c.b16 %v450, %v446
    %v483 = vpack.c.b16 %v451, %v447
    %v484 = vpack.c.b16 %v452, %v448
    %517 = vmatprep.subr.bf16.mxu0 %v454
    %518 = vmatpush1.bf16.msra.mxu0 %v453
    %519 = vmatprep.subr.bf16.mxu0 %v458
    %520 = vmatpush1.bf16.msra.mxu0 %v457
    %521 = vmatprep.subr.bf16.mxu0 %v462
    %522 = vmatpush1.bf16.msra.mxu0 %v461
    %523 = vmatprep.subr.bf16.mxu0 %v466
    %524 = vmatpush1.bf16.msra.mxu0 %v465
    %525 = vmatprep.subr.bf16.mxu0 %v470
    %526 = vmatpush1.bf16.msra.mxu0 %v469
    %527 = vmatprep.subr.bf16.mxu0 %v474
    %528 = vmatpush1.bf16.msra.mxu0 %v473
    %529 = vmatprep.subr.bf16.mxu0 %v478
    %530 = vmatpush1.bf16.msra.mxu0 %v477
    %531 = vmatprep.subr.bf16.mxu0 %v482
    %532 = vmatpush1.bf16.msra.mxu0 %v481
    %533 = vmatprep.subr.bf16.mxu0 0
    %534 = vmatpush1.bf16.msra.mxu0 0
    %535 = vmatprep.subr.bf16.mxu0 0
    %536 = vmatpush1.bf16.msra.mxu0 0
    %537 = vmatprep.subr.bf16.mxu0 0
    %538 = vmatpush1.bf16.msra.mxu0 0
    %539 = vmatprep.subr.bf16.mxu0 0
    %540 = vmatpush1.bf16.msra.mxu0 0
    %541 = vmatprep.subr.bf16.mxu0 0
    %542 = vmatpush1.bf16.msra.mxu0 0
    %543 = vmatprep.subr.bf16.mxu0 0
    %544 = vmatpush1.bf16.msra.mxu0 0
    %545 = vmatprep.subr.bf16.mxu0 0
    %546 = vmatpush1.bf16.msra.mxu0 0
    %547 = vmatprep.subr.bf16.mxu0 0
    %548 = vmatpush1.bf16.msra.mxu0 0
    %549 = vmatprep.mubr.bf16.mxu0 0
    %550 = vmatmul.mubr.bf16.gmra.mrb[0].mxu0 0
    %v551 = vpop.f32.mrb[0].mxu0
    %v552 = vadd.f32 0.0, %v551
    %v553 = vpop.f32.mrb[0].mxu0
    %v554 = vadd.f32 0.0, %v553
    %v555 = vpop.f32.mrb[0].mxu0
    %v556 = vpop.f32.mrb[0].mxu0
    %557 = vdwg.mxu0
    %558 = vmatprep.subr.bf16.mxu0 %v456
    %559 = vmatpush1.bf16.msra.mxu0 %v455
    %560 = vmatprep.subr.bf16.mxu0 %v460
    %561 = vmatpush1.bf16.msra.mxu0 %v459
    %562 = vmatprep.subr.bf16.mxu0 %v464
    %563 = vmatpush1.bf16.msra.mxu0 %v463
    %564 = vmatprep.subr.bf16.mxu0 %v468
    %565 = vmatpush1.bf16.msra.mxu0 %v467
    %566 = vmatprep.subr.bf16.mxu0 %v472
    %567 = vmatpush1.bf16.msra.mxu0 %v471
    %568 = vmatprep.subr.bf16.mxu0 %v476
    %569 = vmatpush1.bf16.msra.mxu0 %v475
    %570 = vmatprep.subr.bf16.mxu0 %v480
    %571 = vmatpush1.bf16.msra.mxu0 %v479
    %572 = vmatprep.subr.bf16.mxu0 %v484
    %573 = vmatpush1.bf16.msra.mxu0 %v483
    %574 = vmatprep.subr.bf16.mxu0 0
    %575 = vmatpush1.bf16.msra.mxu0 0
    %576 = vmatprep.subr.bf16.mxu0 0
    %577 = vmatpush1.bf16.msra.mxu0 0
    %578 = vmatprep.subr.bf16.mxu0 0
    %579 = vmatpush1.bf16.msra.mxu0 0
    %580 = vmatprep.subr.bf16.mxu0 0
    %581 = vmatpush1.bf16.msra.mxu0 0
    %582 = vmatprep.subr.bf16.mxu0 0
    %583 = vmatpush1.bf16.msra.mxu0 0
    %584 = vmatprep.subr.bf16.mxu0 0
    %585 = vmatpush1.bf16.msra.mxu0 0
    %586 = vmatprep.subr.bf16.mxu0 0
    %587 = vmatpush1.bf16.msra.mxu0 0
    %588 = vmatprep.subr.bf16.mxu0 0
    %589 = vmatpush1.bf16.msra.mxu0 0
    %590 = vmatprep.mubr.bf16.mxu0 0
    %591 = vmatmul.mubr.bf16.gmra.mrb[0].mxu0 0
    %v592 = vpop.f32.mrb[0].mxu0
    %v593 = vadd.f32 0.0, %v592
    %v594 = vpop.f32.mrb[0].mxu0
    %v595 = vadd.f32 0.0, %v594
    %v596 = vpop.f32.mrb[0].mxu0
    %v597 = vpop.f32.mrb[0].mxu0
    %598 = vdwg.mxu0
    %v599 = vadd.f32 %v293, %v552
    %v600 = vadd.f32 %v294, %v554
    %v601 = vadd.f32 %v295, %v593
    %v602 = vadd.f32 %v296, %v595
    %v603 = vtanh.pop %v599
    %v604 = vtanh.pop %v600
    %v605 = vtanh.pop %v601
    %v606 = vtanh.pop %v602
    %v607 = vmul.f32 %v603, 0.5
    %v608 = vadd.f32 %v607, 0.5
    %v609 = vmul.f32 %v604, 0.5
    %v610 = vadd.f32 %v609, 0.5
    %v611 = vmul.f32 %v606, 0.5
    %v612 = vadd.f32 %v611, 0.5
    %v613 = vmul.f32 %v610, 0.0
    %v614 = vmul.f32 %v608, %v605
    %v615 = vadd.f32 %v613, %v614
    %v616 = vtanh.pop %v615
    %v617 = vmul.f32 %v612, %v616
    %v618 = vpack.c.bf16 %v617, %v617
    %619 = vmatprep.subr.bf16.mxu0 %v454
    %620 = vmatpush1.bf16.msra.mxu0 %v453
    %621 = vmatprep.subr.bf16.mxu0 %v458
    %622 = vmatpush1.bf16.msra.mxu0 %v457
    %623 = vmatprep.subr.bf16.mxu0 %v462
    %624 = vmatpush1.bf16.msra.mxu0 %v461
    %625 = vmatprep.subr.bf16.mxu0 %v466
    %626 = vmatpush1.bf16.msra.mxu0 %v465
    %627 = vmatprep.subr.bf16.mxu0 %v470
    %628 = vmatpush1.bf16.msra.mxu0 %v469
    %629 = vmatprep.subr.bf16.mxu0 %v474
    %630 = vmatpush1.bf16.msra.mxu0 %v473
    %631 = vmatprep.subr.bf16.mxu0 %v478
    %632 = vmatpush1.bf16.msra.mxu0 %v477
    %633 = vmatprep.subr.bf16.mxu0 %v482
    %634 = vmatpush1.bf16.msra.mxu0 %v481
    %635 = vmatprep.subr.bf16.mxu0 0
    %636 = vmatpush1.bf16.msra.mxu0 0
    %637 = vmatprep.subr.bf16.mxu0 0
    %638 = vmatpush1.bf16.msra.mxu0 0
    %639 = vmatprep.subr.bf16.mxu0 0
    %640 = vmatpush1.bf16.msra.mxu0 0
    %641 = vmatprep.subr.bf16.mxu0 0
    %642 = vmatpush1.bf16.msra.mxu0 0
    %643 = vmatprep.subr.bf16.mxu0 0
    %644 = vmatpush1.bf16.msra.mxu0 0
    %645 = vmatprep.subr.bf16.mxu0 0
    %646 = vmatpush1.bf16.msra.mxu0 0
    %647 = vmatprep.subr.bf16.mxu0 0
    %648 = vmatpush1.bf16.msra.mxu0 0
    %649 = vmatprep.subr.bf16.mxu0 0
    %650 = vmatpush1.bf16.msra.mxu0 0
    %651 = vmatprep.mubr.bf16.mxu0 0
    %652 = vmatmul.mubr.bf16.gmra.mrb[0].mxu0 %v618
    %v653 = vpop.f32.mrb[0].mxu0
    %v654 = vadd.f32 0.0, %v653
    %v655 = vpop.f32.mrb[0].mxu0
    %v656 = vadd.f32 0.0, %v655
    %v657 = vpop.f32.mrb[0].mxu0
    %v658 = vpop.f32.mrb[0].mxu0
    %659 = vdwg.mxu0
    %660 = vmatprep.subr.bf16.mxu0 %v456
    %661 = vmatpush1.bf16.msra.mxu0 %v455
    %662 = vmatprep.subr.bf16.mxu0 %v460
    %663 = vmatpush1.bf16.msra.mxu0 %v459
    %664 = vmatprep.subr.bf16.mxu0 %v464
    %665 = vmatpush1.bf16.msra.mxu0 %v463
    %666 = vmatprep.subr.bf16.mxu0 %v468
    %667 = vmatpush1.bf16.msra.mxu0 %v467
    %668 = vmatprep.subr.bf16.mxu0 %v472
    %669 = vmatpush1.bf16.msra.mxu0 %v471
    %670 = vmatprep.subr.bf16.mxu0 %v476
    %671 = vmatpush1.bf16.msra.mxu0 %v475
    %672 = vmatprep.subr.bf16.mxu0 %v480
    %673 = vmatpush1.bf16.msra.mxu0 %v479
    %674 = vmatprep.subr.bf16.mxu0 %v484
    %675 = vmatpush1.bf16.msra.mxu0 %v483
    %676 = vmatprep.subr.bf16.mxu0 0
    %677 = vmatpush1.bf16.msra.mxu0 0
    %678 = vmatprep.subr.bf16.mxu0 0
    %679 = vmatpush1.bf16.msra.mxu0 0
    %680 = vmatprep.subr.bf16.mxu0 0
    %681 = vmatpush1.bf16.msra.mxu0 0
    %682 = vmatprep.subr.bf16.mxu0 0
    %683 = vmatpush1.bf16.msra.mxu0 0
    %684 = vmatprep.subr.bf16.mxu0 0
    %685 = vmatpush1.bf16.msra.mxu0 0
    %686 = vmatprep.subr.bf16.mxu0 0
    %687 = vmatpush1.bf16.msra.mxu0 0
    %688 = vmatprep.subr.bf16.mxu0 0
    %689 = vmatpush1.bf16.msra.mxu0 0
    %690 = vmatprep.subr.bf16.mxu0 0
    %691 = vmatpush1.bf16.msra.mxu0 0
    %692 = vmatprep.mubr.bf16.mxu0 0
    %693 = vmatmul.mubr.bf16.gmra.mrb[0].mxu0 %v618
    %v694 = vpop.f32.mrb[0].mxu0
    %v695 = vadd.f32 0.0, %v694
    %v696 = vpop.f32.mrb[0].mxu0
    %v697 = vadd.f32 0.0, %v696
    %v698 = vpop.f32.mrb[0].mxu0
    %v699 = vpop.f32.mrb[0].mxu0
    %700 = vdwg.mxu0
    %v701 = vadd.f32 %v297, %v654
    %v702 = vadd.f32 %v298, %v656
    %v703 = vadd.f32 %v299, %v695
    %v704 = vadd.f32 %v300, %v697
    %v705 = vtanh.pop %v701
    %v706 = vtanh.pop %v702
    %v707 = vtanh.pop %v703
    %v708 = vtanh.pop %v704
    %v709 = vmul.f32 %v705, 0.5
    %v710 = vadd.f32 %v709, 0.5
    %v711 = vmul.f32 %v706, 0.5
    %v712 = vadd.f32 %v711, 0.5
    %v713 = vmul.f32 %v708, 0.5
    %v714 = vadd.f32 %v713, 0.5
    %v715 = vmul.f32 %v712, %v615
    %v716 = vmul.f32 %v710, %v707
    %v717 = vadd.f32 %v715, %v716
    %v718 = vtanh.pop %v717
    %v719 = vmul.f32 %v714, %v718
    %v720 = vpack.c.bf16 %v719, %v719
    %721 = vmatprep.subr.bf16.mxu0 %v454
    %722 = vmatpush1.bf16.msra.mxu0 %v453
    %723 = vmatprep.subr.bf16.mxu0 %v458
    %724 = vmatpush1.bf16.msra.mxu0 %v457
    %725 = vmatprep.subr.bf16.mxu0 %v462
    %726 = vmatpush1.bf16.msra.mxu0 %v461
    %727 = vmatprep.subr.bf16.mxu0 %v466
    %728 = vmatpush1.bf16.msra.mxu0 %v465
    %729 = vmatprep.subr.bf16.mxu0 %v470
    %730 = vmatpush1.bf16.msra.mxu0 %v469
    %731 = vmatprep.subr.bf16.mxu0 %v474
    %732 = vmatpush1.bf16.msra.mxu0 %v473
    %733 = vmatprep.subr.bf16.mxu0 %v478
    %734 = vmatpush1.bf16.msra.mxu0 %v477
    %735 = vmatprep.subr.bf16.mxu0 %v482
    %736 = vmatpush1.bf16.msra.mxu0 %v481
    %737 = vmatprep.subr.bf16.mxu0 0
    %738 = vmatpush1.bf16.msra.mxu0 0
    %739 = vmatprep.subr.bf16.mxu0 0
    %740 = vmatpush1.bf16.msra.mxu0 0
    %741 = vmatprep.subr.bf16.mxu0 0
    %742 = vmatpush1.bf16.msra.mxu0 0
    %743 = vmatprep.subr.bf16.mxu0 0
    %744 = vmatpush1.bf16.msra.mxu0 0
    %745 = vmatprep.subr.bf16.mxu0 0
    %746 = vmatpush1.bf16.msra.mxu0 0
    %747 = vmatprep.subr.bf16.mxu0 0
    %748 = vmatpush1.bf16.msra.mxu0 0
    %749 = vmatprep.subr.bf16.mxu0 0
    %750 = vmatpush1.bf16.msra.mxu0 0
    %751 = vmatprep.subr.bf16.mxu0 0
    %752 = vmatpush1.bf16.msra.mxu0 0
    %753 = vmatprep.mubr.bf16.mxu0 0
    %754 = vmatmul.mubr.bf16.gmra.mrb[0].mxu0 %v720
    %v755 = vpop.f32.mrb[0].mxu0
    %v756 = vadd.f32 0.0, %v755
    %v757 = vpop.f32.mrb[0].mxu0
    %v758 = vadd.f32 0.0, %v757
    %v759 = vpop.f32.mrb[0].mxu0
    %v760 = vpop.f32.mrb[0].mxu0
    %761 = vdwg.mxu0
    %762 = vmatprep.subr.bf16.mxu0 %v456
    %763 = vmatpush1.bf16.msra.mxu0 %v455
    %764 = vmatprep.subr.bf16.mxu0 %v460
    %765 = vmatpush1.bf16.msra.mxu0 %v459
    %766 = vmatprep.subr.bf16.mxu0 %v464
    %767 = vmatpush1.bf16.msra.mxu0 %v463
    %768 = vmatprep.subr.bf16.mxu0 %v468
    %769 = vmatpush1.bf16.msra.mxu0 %v467
    %770 = vmatprep.subr.bf16.mxu0 %v472
    %771 = vmatpush1.bf16.msra.mxu0 %v471
    %772 = vmatprep.subr.bf16.mxu0 %v476
    %773 = vmatpush1.bf16.msra.mxu0 %v475
    %774 = vmatprep.subr.bf16.mxu0 %v480
    %775 = vmatpush1.bf16.msra.mxu0 %v479
    %776 = vmatprep.subr.bf16.mxu0 %v484
    %777 = vmatpush1.bf16.msra.mxu0 %v483
    %778 = vmatprep.subr.bf16.mxu0 0
    %779 = vmatpush1.bf16.msra.mxu0 0
    %780 = vmatprep.subr.bf16.mxu0 0
    %781 = vmatpush1.bf16.msra.mxu0 0
    %782 = vmatprep.subr.bf16.mxu0 0
    %783 = vmatpush1.bf16.msra.mxu0 0
    %784 = vmatprep.subr.bf16.mxu0 0
    %785 = vmatpush1.bf16.msra.mxu0 0
    %786 = vmatprep.subr.bf16.mxu0 0
    %787 = vmatpush1.bf16.msra.mxu0 0
    %788 = vmatprep.subr.bf16.mxu0 0
    %789 = vmatpush1.bf16.msra.mxu0 0
    %790 = vmatprep.subr.bf16.mxu0 0
    %791 = vmatpush1.bf16.msra.mxu0 0
    %792 = vmatprep.subr.bf16.mxu0 0
    %793 = vmatpush1.bf16.msra.mxu0 0
    %794 = vmatprep.mubr.bf16.mxu0 0
    %795 = vmatmul.mubr.bf16.gmra.mrb[0].mxu0 %v720
    %v796 = vpop.f32.mrb[0].mxu0
    %v797 = vadd.f32 0.0, %v796
    %v798 = vpop.f32.mrb[0].mxu0
    %v799 = vadd.f32 0.0, %v798
    %v800 = vpop.f32.mrb[0].mxu0
    %v801 = vpop.f32.mrb[0].mxu0
    %802 = vdwg.mxu0
    %v803 = vadd.f32 %v301, %v756
    %v804 = vadd.f32 %v302, %v758
    %v805 = vadd.f32 %v303, %v797
    %v806 = vadd.f32 %v304, %v799
    %v807 = vtanh.pop %v803
    %v808 = vtanh.pop %v804
    %v809 = vtanh.pop %v805
    %v810 = vtanh.pop %v806
    %v811 = vmul.f32 %v807, 0.5
    %v812 = vadd.f32 %v811, 0.5
    %v813 = vmul.f32 %v808, 0.5
    %v814 = vadd.f32 %v813, 0.5
    %v815 = vmul.f32 %v810, 0.5
    %v816 = vadd.f32 %v815, 0.5
    %v817 = vmul.f32 %v814, %v717
    %v818 = vmul.f32 %v812, %v809
    %v819 = vadd.f32 %v817, %v818
    %v820 = vtanh.pop %v819
    %v821 = vmul.f32 %v816, %v820
    %v822 = vpack.c.bf16 %v821, %v821
    %823 = vmatprep.subr.bf16.mxu0 %v454
    %824 = vmatpush1.bf16.msra.mxu0 %v453
    %825 = vmatprep.subr.bf16.mxu0 %v458
    %826 = vmatpush1.bf16.msra.mxu0 %v457
    %827 = vmatprep.subr.bf16.mxu0 %v462
    %828 = vmatpush1.bf16.msra.mxu0 %v461
    %829 = vmatprep.subr.bf16.mxu0 %v466
    %830 = vmatpush1.bf16.msra.mxu0 %v465
    %831 = vmatprep.subr.bf16.mxu0 %v470
    %832 = vmatpush1.bf16.msra.mxu0 %v469
    %833 = vmatprep.subr.bf16.mxu0 %v474
    %834 = vmatpush1.bf16.msra.mxu0 %v473
    %835 = vmatprep.subr.bf16.mxu0 %v478
    %836 = vmatpush1.bf16.msra.mxu0 %v477
    %837 = vmatprep.subr.bf16.mxu0 %v482
    %838 = vmatpush1.bf16.msra.mxu0 %v481
    %839 = vmatprep.subr.bf16.mxu0 0
    %840 = vmatpush1.bf16.msra.mxu0 0
    %841 = vmatprep.subr.bf16.mxu0 0
    %842 = vmatpush1.bf16.msra.mxu0 0
    %843 = vmatprep.subr.bf16.mxu0 0
    %844 = vmatpush1.bf16.msra.mxu0 0
    %845 = vmatprep.subr.bf16.mxu0 0
    %846 = vmatpush1.bf16.msra.mxu0 0
    %847 = vmatprep.subr.bf16.mxu0 0
    %848 = vmatpush1.bf16.msra.mxu0 0
    %849 = vmatprep.subr.bf16.mxu0 0
    %850 = vmatpush1.bf16.msra.mxu0 0
    %851 = vmatprep.subr.bf16.mxu0 0
    %852 = vmatpush1.bf16.msra.mxu0 0
    %853 = vmatprep.subr.bf16.mxu0 0
    %854 = vmatpush1.bf16.msra.mxu0 0
    %855 = vmatprep.mubr.bf16.mxu0 0
    %856 = vmatmul.mubr.bf16.gmra.mrb[0].mxu0 %v822
    %v857 = vpop.f32.mrb[0].mxu0
    %v858 = vadd.f32 0.0, %v857
    %v859 = vpop.f32.mrb[0].mxu0
    %v860 = vadd.f32 0.0, %v859
    %v861 = vpop.f32.mrb[0].mxu0
    %v862 = vpop.f32.mrb[0].mxu0
    %863 = vdwg.mxu0
    %864 = vmatprep.subr.bf16.mxu0 %v456
    %865 = vmatpush1.bf16.msra.mxu0 %v455
    %866 = vmatprep.subr.bf16.mxu0 %v460
    %867 = vmatpush1.bf16.msra.mxu0 %v459
    %868 = vmatprep.subr.bf16.mxu0 %v464
    %869 = vmatpush1.bf16.msra.mxu0 %v463
    %870 = vmatprep.subr.bf16.mxu0 %v468
    %871 = vmatpush1.bf16.msra.mxu0 %v467
    %872 = vmatprep.subr.bf16.mxu0 %v472
    %873 = vmatpush1.bf16.msra.mxu0 %v471
    %874 = vmatprep.subr.bf16.mxu0 %v476
    %875 = vmatpush1.bf16.msra.mxu0 %v475
    %876 = vmatprep.subr.bf16.mxu0 %v480
    %877 = vmatpush1.bf16.msra.mxu0 %v479
    %878 = vmatprep.subr.bf16.mxu0 %v484
    %879 = vmatpush1.bf16.msra.mxu0 %v483
    %880 = vmatprep.subr.bf16.mxu0 0
    %881 = vmatpush1.bf16.msra.mxu0 0
    %882 = vmatprep.subr.bf16.mxu0 0
    %883 = vmatpush1.bf16.msra.mxu0 0
    %884 = vmatprep.subr.bf16.mxu0 0
    %885 = vmatpush1.bf16.msra.mxu0 0
    %886 = vmatprep.subr.bf16.mxu0 0
    %887 = vmatpush1.bf16.msra.mxu0 0
    %888 = vmatprep.subr.bf16.mxu0 0
    %889 = vmatpush1.bf16.msra.mxu0 0
    %890 = vmatprep.subr.bf16.mxu0 0
    %891 = vmatpush1.bf16.msra.mxu0 0
    %892 = vmatprep.subr.bf16.mxu0 0
    %893 = vmatpush1.bf16.msra.mxu0 0
    %894 = vmatprep.subr.bf16.mxu0 0
    %895 = vmatpush1.bf16.msra.mxu0 0
    %896 = vmatprep.mubr.bf16.mxu0 0
    %897 = vmatmul.mubr.bf16.gmra.mrb[0].mxu0 %v822
    %v898 = vpop.f32.mrb[0].mxu0
    %v899 = vadd.f32 0.0, %v898
    %v900 = vpop.f32.mrb[0].mxu0
    %v901 = vadd.f32 0.0, %v900
    %v902 = vpop.f32.mrb[0].mxu0
    %v903 = vpop.f32.mrb[0].mxu0
    %904 = vdwg.mxu0
    %v905 = vadd.f32 %v305, %v858
    %v906 = vadd.f32 %v306, %v860
    %v907 = vadd.f32 %v307, %v899
    %v908 = vadd.f32 %v308, %v901
    %v909 = vtanh.pop %v905
    %v910 = vtanh.pop %v906
    %v911 = vtanh.pop %v907
    %v912 = vtanh.pop %v908
    %v913 = vmul.f32 %v909, 0.5
    %v914 = vadd.f32 %v913, 0.5
    %v915 = vmul.f32 %v910, 0.5
    %v916 = vadd.f32 %v915, 0.5
    %v917 = vmul.f32 %v912, 0.5
    %v918 = vadd.f32 %v917, 0.5
    %v919 = vmul.f32 %v916, %v819
    %v920 = vmul.f32 %v914, %v911
    %v921 = vadd.f32 %v919, %v920
    %v922 = vtanh.pop %v921
    %v923 = vmul.f32 %v918, %v922
    %v924 = vpack.c.bf16 %v923, %v923
    %925 = vmatprep.subr.bf16.mxu0 %v454
    %926 = vmatpush1.bf16.msra.mxu0 %v453
    %927 = vmatprep.subr.bf16.mxu0 %v458
    %928 = vmatpush1.bf16.msra.mxu0 %v457
    %929 = vmatprep.subr.bf16.mxu0 %v462
    %930 = vmatpush1.bf16.msra.mxu0 %v461
    %931 = vmatprep.subr.bf16.mxu0 %v466
    %932 = vmatpush1.bf16.msra.mxu0 %v465
    %933 = vmatprep.subr.bf16.mxu0 %v470
    %934 = vmatpush1.bf16.msra.mxu0 %v469
    %935 = vmatprep.subr.bf16.mxu0 %v474
    %936 = vmatpush1.bf16.msra.mxu0 %v473
    %937 = vmatprep.subr.bf16.mxu0 %v478
    %938 = vmatpush1.bf16.msra.mxu0 %v477
    %939 = vmatprep.subr.bf16.mxu0 %v482
    %940 = vmatpush1.bf16.msra.mxu0 %v481
    %941 = vmatprep.subr.bf16.mxu0 0
    %942 = vmatpush1.bf16.msra.mxu0 0
    %943 = vmatprep.subr.bf16.mxu0 0
    %944 = vmatpush1.bf16.msra.mxu0 0
    %945 = vmatprep.subr.bf16.mxu0 0
    %946 = vmatpush1.bf16.msra.mxu0 0
    %947 = vmatprep.subr.bf16.mxu0 0
    %948 = vmatpush1.bf16.msra.mxu0 0
    %949 = vmatprep.subr.bf16.mxu0 0
    %950 = vmatpush1.bf16.msra.mxu0 0
    %951 = vmatprep.subr.bf16.mxu0 0
    %952 = vmatpush1.bf16.msra.mxu0 0
    %953 = vmatprep.subr.bf16.mxu0 0
    %954 = vmatpush1.bf16.msra.mxu0 0
    %955 = vmatprep.subr.bf16.mxu0 0
    %956 = vmatpush1.bf16.msra.mxu0 0
    %957 = vmatprep.mubr.bf16.mxu0 0
    %958 = vmatmul.mubr.bf16.gmra.mrb[0].mxu0 %v924
    %v959 = vpop.f32.mrb[0].mxu0
    %v960 = vadd.f32 0.0, %v959
    %v961 = vpop.f32.mrb[0].mxu0
    %v962 = vadd.f32 0.0, %v961
    %v963 = vpop.f32.mrb[0].mxu0
    %v964 = vpop.f32.mrb[0].mxu0
    %965 = vdwg.mxu0
    %966 = vmatprep.subr.bf16.mxu0 %v456
    %967 = vmatpush1.bf16.msra.mxu0 %v455
    %968 = vmatprep.subr.bf16.mxu0 %v460
    %969 = vmatpush1.bf16.msra.mxu0 %v459
    %970 = vmatprep.subr.bf16.mxu0 %v464
    %971 = vmatpush1.bf16.msra.mxu0 %v463
    %972 = vmatprep.subr.bf16.mxu0 %v468
    %973 = vmatpush1.bf16.msra.mxu0 %v467
    %974 = vmatprep.subr.bf16.mxu0 %v472
    %975 = vmatpush1.bf16.msra.mxu0 %v471
    %976 = vmatprep.subr.bf16.mxu0 %v476
    %977 = vmatpush1.bf16.msra.mxu0 %v475
    %978 = vmatprep.subr.bf16.mxu0 %v480
    %979 = vmatpush1.bf16.msra.mxu0 %v479
    %980 = vmatprep.subr.bf16.mxu0 %v484
    %981 = vmatpush1.bf16.msra.mxu0 %v483
    %982 = vmatprep.subr.bf16.mxu0 0
    %983 = vmatpush1.bf16.msra.mxu0 0
    %984 = vmatprep.subr.bf16.mxu0 0
    %985 = vmatpush1.bf16.msra.mxu0 0
    %986 = vmatprep.subr.bf16.mxu0 0
    %987 = vmatpush1.bf16.msra.mxu0 0
    %988 = vmatprep.subr.bf16.mxu0 0
    %989 = vmatpush1.bf16.msra.mxu0 0
    %990 = vmatprep.subr.bf16.mxu0 0
    %991 = vmatpush1.bf16.msra.mxu0 0
    %992 = vmatprep.subr.bf16.mxu0 0
    %993 = vmatpush1.bf16.msra.mxu0 0
    %994 = vmatprep.subr.bf16.mxu0 0
    %995 = vmatpush1.bf16.msra.mxu0 0
    %996 = vmatprep.subr.bf16.mxu0 0
    %997 = vmatpush1.bf16.msra.mxu0 0
    %998 = vmatprep.mubr.bf16.mxu0 0
    %999 = vmatmul.mubr.bf16.gmra.mrb[0].mxu0 %v924
    %v1000 = vpop.f32.mrb[0].mxu0
    %v1001 = vadd.f32 0.0, %v1000
    %v1002 = vpop.f32.mrb[0].mxu0
    %v1003 = vadd.f32 0.0, %v1002
    %v1004 = vpop.f32.mrb[0].mxu0
    %v1005 = vpop.f32.mrb[0].mxu0
    %1006 = vdwg.mxu0
    %v1007 = vadd.f32 %v309, %v960
    %v1008 = vadd.f32 %v310, %v962
    %v1009 = vadd.f32 %v311, %v1001
    %v1010 = vadd.f32 %v312, %v1003
    %v1011 = vtanh.pop %v1007
    %v1012 = vtanh.pop %v1008
    %v1013 = vtanh.pop %v1009
    %v1014 = vtanh.pop %v1010
    %v1015 = vmul.f32 %v1011, 0.5
    %v1016 = vadd.f32 %v1015, 0.5
    %v1017 = vmul.f32 %v1012, 0.5
    %v1018 = vadd.f32 %v1017, 0.5
    %v1019 = vmul.f32 %v1014, 0.5
    %v1020 = vadd.f32 %v1019, 0.5
    %v1021 = vmul.f32 %v1018, %v921
    %v1022 = vmul.f32 %v1016, %v1013
    %v1023 = vadd.f32 %v1021, %v1022
    %v1024 = vtanh.pop %v1023
    %v1025 = vmul.f32 %v1020, %v1024
    %v1026 = vpack.c.bf16 %v1025, %v1025
    %1027 = vmatprep.subr.bf16.mxu0 %v454
    %1028 = vmatpush1.bf16.msra.mxu0 %v453
    %1029 = vmatprep.subr.bf16.mxu0 %v458
    %1030 = vmatpush1.bf16.msra.mxu0 %v457
    %1031 = vmatprep.subr.bf16.mxu0 %v462
    %1032 = vmatpush1.bf16.msra.mxu0 %v461
    %1033 = vmatprep.subr.bf16.mxu0 %v466
    %1034 = vmatpush1.bf16.msra.mxu0 %v465
    %1035 = vmatprep.subr.bf16.mxu0 %v470
    %1036 = vmatpush1.bf16.msra.mxu0 %v469
    %1037 = vmatprep.subr.bf16.mxu0 %v474
    %1038 = vmatpush1.bf16.msra.mxu0 %v473
    %1039 = vmatprep.subr.bf16.mxu0 %v478
    %1040 = vmatpush1.bf16.msra.mxu0 %v477
    %1041 = vmatprep.subr.bf16.mxu0 %v482
    %1042 = vmatpush1.bf16.msra.mxu0 %v481
    %1043 = vmatprep.subr.bf16.mxu0 0
    %1044 = vmatpush1.bf16.msra.mxu0 0
    %1045 = vmatprep.subr.bf16.mxu0 0
    %1046 = vmatpush1.bf16.msra.mxu0 0
    %1047 = vmatprep.subr.bf16.mxu0 0
    %1048 = vmatpush1.bf16.msra.mxu0 0
    %1049 = vmatprep.subr.bf16.mxu0 0
    %1050 = vmatpush1.bf16.msra.mxu0 0
    %1051 = vmatprep.subr.bf16.mxu0 0
    %1052 = vmatpush1.bf16.msra.mxu0 0
    %1053 = vmatprep.subr.bf16.mxu0 0
    %1054 = vmatpush1.bf16.msra.mxu0 0
    %1055 = vmatprep.subr.bf16.mxu0 0
    %1056 = vmatpush1.bf16.msra.mxu0 0
    %1057 = vmatprep.subr.bf16.mxu0 0
    %1058 = vmatpush1.bf16.msra.mxu0 0
    %1059 = vmatprep.mubr.bf16.mxu0 0
    %1060 = vmatmul.mubr.bf16.gmra.mrb[0].mxu0 %v1026
    %v1061 = vpop.f32.mrb[0].mxu0
    %v1062 = vadd.f32 0.0, %v1061
    %v1063 = vpop.f32.mrb[0].mxu0
    %v1064 = vadd.f32 0.0, %v1063
    %v1065 = vpop.f32.mrb[0].mxu0
    %v1066 = vpop.f32.mrb[0].mxu0
    %1067 = vdwg.mxu0
    %1068 = vmatprep.subr.bf16.mxu0 %v456
    %1069 = vmatpush1.bf16.msra.mxu0 %v455
    %1070 = vmatprep.subr.bf16.mxu0 %v460
    %1071 = vmatpush1.bf16.msra.mxu0 %v459
    %1072 = vmatprep.subr.bf16.mxu0 %v464
    %1073 = vmatpush1.bf16.msra.mxu0 %v463
    %1074 = vmatprep.subr.bf16.mxu0 %v468
    %1075 = vmatpush1.bf16.msra.mxu0 %v467
    %1076 = vmatprep.subr.bf16.mxu0 %v472
    %1077 = vmatpush1.bf16.msra.mxu0 %v471
    %1078 = vmatprep.subr.bf16.mxu0 %v476
    %1079 = vmatpush1.bf16.msra.mxu0 %v475
    %1080 = vmatprep.subr.bf16.mxu0 %v480
    %1081 = vmatpush1.bf16.msra.mxu0 %v479
    %1082 = vmatprep.subr.bf16.mxu0 %v484
    %1083 = vmatpush1.bf16.msra.mxu0 %v483
    %1084 = vmatprep.subr.bf16.mxu0 0
    %1085 = vmatpush1.bf16.msra.mxu0 0
    %1086 = vmatprep.subr.bf16.mxu0 0
    %1087 = vmatpush1.bf16.msra.mxu0 0
    %1088 = vmatprep.subr.bf16.mxu0 0
    %1089 = vmatpush1.bf16.msra.mxu0 0
    %1090 = vmatprep.subr.bf16.mxu0 0
    %1091 = vmatpush1.bf16.msra.mxu0 0
    %1092 = vmatprep.subr.bf16.mxu0 0
    %1093 = vmatpush1.bf16.msra.mxu0 0
    %1094 = vmatprep.subr.bf16.mxu0 0
    %1095 = vmatpush1.bf16.msra.mxu0 0
    %1096 = vmatprep.subr.bf16.mxu0 0
    %1097 = vmatpush1.bf16.msra.mxu0 0
    %1098 = vmatprep.subr.bf16.mxu0 0
    %1099 = vmatpush1.bf16.msra.mxu0 0
    %1100 = vmatprep.mubr.bf16.mxu0 0
    %1101 = vmatmul.mubr.bf16.gmra.mrb[0].mxu0 %v1026
    %v1102 = vpop.f32.mrb[0].mxu0
    %v1103 = vadd.f32 0.0, %v1102
    %v1104 = vpop.f32.mrb[0].mxu0
    %v1105 = vadd.f32 0.0, %v1104
    %v1106 = vpop.f32.mrb[0].mxu0
    %v1107 = vpop.f32.mrb[0].mxu0
    %1108 = vdwg.mxu0
    %v1109 = vadd.f32 %v313, %v1062
    %v1110 = vadd.f32 %v314, %v1064
    %v1111 = vadd.f32 %v315, %v1103
    %v1112 = vadd.f32 %v316, %v1105
    %v1113 = vtanh.pop %v1109
    %v1114 = vtanh.pop %v1110
    %v1115 = vtanh.pop %v1111
    %v1116 = vtanh.pop %v1112
    %v1117 = vmul.f32 %v1113, 0.5
    %v1118 = vadd.f32 %v1117, 0.5
    %v1119 = vmul.f32 %v1114, 0.5
    %v1120 = vadd.f32 %v1119, 0.5
    %v1121 = vmul.f32 %v1116, 0.5
    %v1122 = vadd.f32 %v1121, 0.5
    %v1123 = vmul.f32 %v1120, %v1023
    %v1124 = vmul.f32 %v1118, %v1115
    %v1125 = vadd.f32 %v1123, %v1124
    %v1126 = vtanh.pop %v1125
    %v1127 = vmul.f32 %v1122, %v1126
    %v1128 = vpack.c.bf16 %v1127, %v1127
    %1129 = vmatprep.subr.bf16.mxu0 %v454
    %1130 = vmatpush1.bf16.msra.mxu0 %v453
    %1131 = vmatprep.subr.bf16.mxu0 %v458
    %1132 = vmatpush1.bf16.msra.mxu0 %v457
    %1133 = vmatprep.subr.bf16.mxu0 %v462
    %1134 = vmatpush1.bf16.msra.mxu0 %v461
    %1135 = vmatprep.subr.bf16.mxu0 %v466
    %1136 = vmatpush1.bf16.msra.mxu0 %v465
    %1137 = vmatprep.subr.bf16.mxu0 %v470
    %1138 = vmatpush1.bf16.msra.mxu0 %v469
    %1139 = vmatprep.subr.bf16.mxu0 %v474
    %1140 = vmatpush1.bf16.msra.mxu0 %v473
    %1141 = vmatprep.subr.bf16.mxu0 %v478
    %1142 = vmatpush1.bf16.msra.mxu0 %v477
    %1143 = vmatprep.subr.bf16.mxu0 %v482
    %1144 = vmatpush1.bf16.msra.mxu0 %v481
    %1145 = vmatprep.subr.bf16.mxu0 0
    %1146 = vmatpush1.bf16.msra.mxu0 0
    %1147 = vmatprep.subr.bf16.mxu0 0
    %1148 = vmatpush1.bf16.msra.mxu0 0
    %1149 = vmatprep.subr.bf16.mxu0 0
    %1150 = vmatpush1.bf16.msra.mxu0 0
    %1151 = vmatprep.subr.bf16.mxu0 0
    %1152 = vmatpush1.bf16.msra.mxu0 0
    %1153 = vmatprep.subr.bf16.mxu0 0
    %1154 = vmatpush1.bf16.msra.mxu0 0
    %1155 = vmatprep.subr.bf16.mxu0 0
    %1156 = vmatpush1.bf16.msra.mxu0 0
    %1157 = vmatprep.subr.bf16.mxu0 0
    %1158 = vmatpush1.bf16.msra.mxu0 0
    %1159 = vmatprep.subr.bf16.mxu0 0
    %1160 = vmatpush1.bf16.msra.mxu0 0
    %1161 = vmatprep.mubr.bf16.mxu0 0
    %1162 = vmatmul.mubr.bf16.gmra.mrb[0].mxu0 %v1128
    %v1163 = vpop.f32.mrb[0].mxu0
    %v1164 = vadd.f32 0.0, %v1163
    %v1165 = vpop.f32.mrb[0].mxu0
    %v1166 = vadd.f32 0.0, %v1165
    %v1167 = vpop.f32.mrb[0].mxu0
    %v1168 = vpop.f32.mrb[0].mxu0
    %1169 = vdwg.mxu0
    %1170 = vmatprep.subr.bf16.mxu0 %v456
    %1171 = vmatpush1.bf16.msra.mxu0 %v455
    %1172 = vmatprep.subr.bf16.mxu0 %v460
    %1173 = vmatpush1.bf16.msra.mxu0 %v459
    %1174 = vmatprep.subr.bf16.mxu0 %v464
    %1175 = vmatpush1.bf16.msra.mxu0 %v463
    %1176 = vmatprep.subr.bf16.mxu0 %v468
    %1177 = vmatpush1.bf16.msra.mxu0 %v467
    %1178 = vmatprep.subr.bf16.mxu0 %v472
    %1179 = vmatpush1.bf16.msra.mxu0 %v471
    %1180 = vmatprep.subr.bf16.mxu0 %v476
    %1181 = vmatpush1.bf16.msra.mxu0 %v475
    %1182 = vmatprep.subr.bf16.mxu0 %v480
    %1183 = vmatpush1.bf16.msra.mxu0 %v479
    %1184 = vmatprep.subr.bf16.mxu0 %v484
    %1185 = vmatpush1.bf16.msra.mxu0 %v483
    %1186 = vmatprep.subr.bf16.mxu0 0
    %1187 = vmatpush1.bf16.msra.mxu0 0
    %1188 = vmatprep.subr.bf16.mxu0 0
    %1189 = vmatpush1.bf16.msra.mxu0 0
    %1190 = vmatprep.subr.bf16.mxu0 0
    %1191 = vmatpush1.bf16.msra.mxu0 0
    %1192 = vmatprep.subr.bf16.mxu0 0
    %1193 = vmatpush1.bf16.msra.mxu0 0
    %1194 = vmatprep.subr.bf16.mxu0 0
    %1195 = vmatpush1.bf16.msra.mxu0 0
    %1196 = vmatprep.subr.bf16.mxu0 0
    %1197 = vmatpush1.bf16.msra.mxu0 0
    %1198 = vmatprep.subr.bf16.mxu0 0
    %1199 = vmatpush1.bf16.msra.mxu0 0
    %1200 = vmatprep.subr.bf16.mxu0 0
    %1201 = vmatpush1.bf16.msra.mxu0 0
    %1202 = vmatprep.mubr.bf16.mxu0 0
    %1203 = vmatmul.mubr.bf16.gmra.mrb[0].mxu0 %v1128
    %v1204 = vpop.f32.mrb[0].mxu0
    %v1205 = vadd.f32 0.0, %v1204
    %v1206 = vpop.f32.mrb[0].mxu0
    %v1207 = vadd.f32 0.0, %v1206
    %v1208 = vpop.f32.mrb[0].mxu0
    %v1209 = vpop.f32.mrb[0].mxu0
    %1210 = vdwg.mxu0
    %v1211 = vadd.f32 %v317, %v1164
    %v1212 = vadd.f32 %v318, %v1166
    %v1213 = vadd.f32 %v319, %v1205
    %v1214 = vadd.f32 %v320, %v1207
    %v1215 = vtanh.pop %v1211
    %v1216 = vtanh.pop %v1212
    %v1217 = vtanh.pop %v1213
    %v1218 = vtanh.pop %v1214
    %v1219 = vmul.f32 %v1215, 0.5
    %v1220 = vadd.f32 %v1219, 0.5
    %v1221 = vmul.f32 %v1216, 0.5
    %v1222 = vadd.f32 %v1221, 0.5
    %v1223 = vmul.f32 %v1218, 0.5
    %v1224 = vadd.f32 %v1223, 0.5
    %v1225 = vmul.f32 %v1222, %v1125
    %v1226 = vmul.f32 %v1220, %v1217
    %v1227 = vadd.f32 %v1225, %v1226
    %v1228 = vtanh.pop %v1227
    %v1229 = vmul.f32 %v1224, %v1228
    %v1230 = vpack.c.bf16 %v1229, %v1229
    %1231 = vmatprep.subr.bf16.mxu0 %v454
    %1232 = vmatpush1.bf16.msra.mxu0 %v453
    %1233 = vmatprep.subr.bf16.mxu0 %v458
    %1234 = vmatpush1.bf16.msra.mxu0 %v457
    %1235 = vmatprep.subr.bf16.mxu0 %v462
    %1236 = vmatpush1.bf16.msra.mxu0 %v461
    %1237 = vmatprep.subr.bf16.mxu0 %v466
    %1238 = vmatpush1.bf16.msra.mxu0 %v465
    %1239 = vmatprep.subr.bf16.mxu0 %v470
    %1240 = vmatpush1.bf16.msra.mxu0 %v469
    %1241 = vmatprep.subr.bf16.mxu0 %v474
    %1242 = vmatpush1.bf16.msra.mxu0 %v473
    %1243 = vmatprep.subr.bf16.mxu0 %v478
    %1244 = vmatpush1.bf16.msra.mxu0 %v477
    %1245 = vmatprep.subr.bf16.mxu0 %v482
    %1246 = vmatpush1.bf16.msra.mxu0 %v481
    %1247 = vmatprep.subr.bf16.mxu0 0
    %1248 = vmatpush1.bf16.msra.mxu0 0
    %1249 = vmatprep.subr.bf16.mxu0 0
    %1250 = vmatpush1.bf16.msra.mxu0 0
    %1251 = vmatprep.subr.bf16.mxu0 0
    %1252 = vmatpush1.bf16.msra.mxu0 0
    %1253 = vmatprep.subr.bf16.mxu0 0
    %1254 = vmatpush1.bf16.msra.mxu0 0
    %1255 = vmatprep.subr.bf16.mxu0 0
    %1256 = vmatpush1.bf16.msra.mxu0 0
    %1257 = vmatprep.subr.bf16.mxu0 0
    %1258 = vmatpush1.bf16.msra.mxu0 0
    %1259 = vmatprep.subr.bf16.mxu0 0
    %1260 = vmatpush1.bf16.msra.mxu0 0
    %1261 = vmatprep.subr.bf16.mxu0 0
    %1262 = vmatpush1.bf16.msra.mxu0 0
    %1263 = vmatprep.mubr.bf16.mxu0 0
    %1264 = vmatmul.mubr.bf16.gmra.mrb[0].mxu0 %v1230
    %v1265 = vpop.f32.mrb[0].mxu0
    %v1266 = vadd.f32 0.0, %v1265
    %v1267 = vpop.f32.mrb[0].mxu0
    %v1268 = vadd.f32 0.0, %v1267
    %v1269 = vpop.f32.mrb[0].mxu0
    %v1270 = vpop.f32.mrb[0].mxu0
    %1271 = vdwg.mxu0
    %1272 = vmatprep.subr.bf16.mxu0 %v456
    %1273 = vmatpush1.bf16.msra.mxu0 %v455
    %1274 = vmatprep.subr.bf16.mxu0 %v460
    %1275 = vmatpush1.bf16.msra.mxu0 %v459
    %1276 = vmatprep.subr.bf16.mxu0 %v464
    %1277 = vmatpush1.bf16.msra.mxu0 %v463
    %1278 = vmatprep.subr.bf16.mxu0 %v468
    %1279 = vmatpush1.bf16.msra.mxu0 %v467
    %1280 = vmatprep.subr.bf16.mxu0 %v472
    %1281 = vmatpush1.bf16.msra.mxu0 %v471
    %1282 = vmatprep.subr.bf16.mxu0 %v476
    %1283 = vmatpush1.bf16.msra.mxu0 %v475
    %1284 = vmatprep.subr.bf16.mxu0 %v480
    %1285 = vmatpush1.bf16.msra.mxu0 %v479
    %1286 = vmatprep.subr.bf16.mxu0 %v484
    %1287 = vmatpush1.bf16.msra.mxu0 %v483
    %1288 = vmatprep.subr.bf16.mxu0 0
    %1289 = vmatpush1.bf16.msra.mxu0 0
    %1290 = vmatprep.subr.bf16.mxu0 0
    %1291 = vmatpush1.bf16.msra.mxu0 0
    %1292 = vmatprep.subr.bf16.mxu0 0
    %1293 = vmatpush1.bf16.msra.mxu0 0
    %1294 = vmatprep.subr.bf16.mxu0 0
    %1295 = vmatpush1.bf16.msra.mxu0 0
    %1296 = vmatprep.subr.bf16.mxu0 0
    %1297 = vmatpush1.bf16.msra.mxu0 0
    %1298 = vmatprep.subr.bf16.mxu0 0
    %1299 = vmatpush1.bf16.msra.mxu0 0
    %1300 = vmatprep.subr.bf16.mxu0 0
    %1301 = vmatpush1.bf16.msra.mxu0 0
    %1302 = vmatprep.subr.bf16.mxu0 0
    %1303 = vmatpush1.bf16.msra.mxu0 0
    %1304 = vmatprep.mubr.bf16.mxu0 0
    %1305 = vmatmul.mubr.bf16.gmra.mrb[0].mxu0 %v1230
    %v1306 = vpop.f32.mrb[0].mxu0
    %v1307 = vadd.f32 0.0, %v1306
    %v1308 = vpop.f32.mrb[0].mxu0
    %v1309 = vadd.f32 0.0, %v1308
    %v1310 = vpop.f32.mrb[0].mxu0
    %v1311 = vpop.f32.mrb[0].mxu0
    %1312 = vdwg.mxu0
    %v1313 = vadd.f32 %v321, %v1266
    %v1314 = vadd.f32 %v322, %v1268
    %v1315 = vadd.f32 %v323, %v1307
    %v1316 = vadd.f32 %v324, %v1309
    %v1317 = vtanh.pop %v1313
    %v1318 = vtanh.pop %v1314
    %v1319 = vtanh.pop %v1315
    %v1320 = vtanh.pop %v1316
    %v1321 = vmul.f32 %v1317, 0.5
    %v1322 = vadd.f32 %v1321, 0.5
    %v1323 = vmul.f32 %v1318, 0.5
    %v1324 = vadd.f32 %v1323, 0.5
    %v1325 = vmul.f32 %v1320, 0.5
    %v1326 = vadd.f32 %v1325, 0.5
    %v1327 = vmul.f32 %v1324, %v1227
    %v1328 = vmul.f32 %v1322, %v1319
    %v1329 = vadd.f32 %v1327, %v1328
    %v1330 = vtanh.pop %v1329
    %v1331 = vmul.f32 %v1326, %v1330
    %v1332 = vpack.c.bf16 %v1331, %v1331
    %1333 = vmatprep.subr.bf16.mxu0 %v454
    %1334 = vmatpush1.bf16.msra.mxu0 %v453
    %1335 = vmatprep.subr.bf16.mxu0 %v458
    %1336 = vmatpush1.bf16.msra.mxu0 %v457
    %1337 = vmatprep.subr.bf16.mxu0 %v462
    %1338 = vmatpush1.bf16.msra.mxu0 %v461
    %1339 = vmatprep.subr.bf16.mxu0 %v466
    %1340 = vmatpush1.bf16.msra.mxu0 %v465
    %1341 = vmatprep.subr.bf16.mxu0 %v470
    %1342 = vmatpush1.bf16.msra.mxu0 %v469
    %1343 = vmatprep.subr.bf16.mxu0 %v474
    %1344 = vmatpush1.bf16.msra.mxu0 %v473
    %1345 = vmatprep.subr.bf16.mxu0 %v478
    %1346 = vmatpush1.bf16.msra.mxu0 %v477
    %1347 = vmatprep.subr.bf16.mxu0 %v482
    %1348 = vmatpush1.bf16.msra.mxu0 %v481
    %1349 = vmatprep.subr.bf16.mxu0 0
    %1350 = vmatpush1.bf16.msra.mxu0 0
    %1351 = vmatprep.subr.bf16.mxu0 0
    %1352 = vmatpush1.bf16.msra.mxu0 0
    %1353 = vmatprep.subr.bf16.mxu0 0
    %1354 = vmatpush1.bf16.msra.mxu0 0
    %1355 = vmatprep.subr.bf16.mxu0 0
    %1356 = vmatpush1.bf16.msra.mxu0 0
    %1357 = vmatprep.subr.bf16.mxu0 0
    %1358 = vmatpush1.bf16.msra.mxu0 0
    %1359 = vmatprep.subr.bf16.mxu0 0
    %1360 = vmatpush1.bf16.msra.mxu0 0
    %1361 = vmatprep.subr.bf16.mxu0 0
    %1362 = vmatpush1.bf16.msra.mxu0 0
    %1363 = vmatprep.subr.bf16.mxu0 0
    %1364 = vmatpush1.bf16.msra.mxu0 0
    %1365 = vmatprep.mubr.bf16.mxu0 0
    %1366 = vmatmul.mubr.bf16.gmra.mrb[0].mxu0 %v1332
    %v1367 = vpop.f32.mrb[0].mxu0
    %v1368 = vadd.f32 0.0, %v1367
    %v1369 = vpop.f32.mrb[0].mxu0
    %v1370 = vadd.f32 0.0, %v1369
    %v1371 = vpop.f32.mrb[0].mxu0
    %v1372 = vpop.f32.mrb[0].mxu0
    %1373 = vdwg.mxu0
    %1374 = vmatprep.subr.bf16.mxu0 %v456
    %1375 = vmatpush1.bf16.msra.mxu0 %v455
    %1376 = vmatprep.subr.bf16.mxu0 %v460
    %1377 = vmatpush1.bf16.msra.mxu0 %v459
    %1378 = vmatprep.subr.bf16.mxu0 %v464
    %1379 = vmatpush1.bf16.msra.mxu0 %v463
    %1380 = vmatprep.subr.bf16.mxu0 %v468
    %1381 = vmatpush1.bf16.msra.mxu0 %v467
    %1382 = vmatprep.subr.bf16.mxu0 %v472
    %1383 = vmatpush1.bf16.msra.mxu0 %v471
    %1384 = vmatprep.subr.bf16.mxu0 %v476
    %1385 = vmatpush1.bf16.msra.mxu0 %v475
    %1386 = vmatprep.subr.bf16.mxu0 %v480
    %1387 = vmatpush1.bf16.msra.mxu0 %v479
    %1388 = vmatprep.subr.bf16.mxu0 %v484
    %1389 = vmatpush1.bf16.msra.mxu0 %v483
    %1390 = vmatprep.subr.bf16.mxu0 0
    %1391 = vmatpush1.bf16.msra.mxu0 0
    %1392 = vmatprep.subr.bf16.mxu0 0
    %1393 = vmatpush1.bf16.msra.mxu0 0
    %1394 = vmatprep.subr.bf16.mxu0 0
    %1395 = vmatpush1.bf16.msra.mxu0 0
    %1396 = vmatprep.subr.bf16.mxu0 0
    %1397 = vmatpush1.bf16.msra.mxu0 0
    %1398 = vmatprep.subr.bf16.mxu0 0
    %1399 = vmatpush1.bf16.msra.mxu0 0
    %1400 = vmatprep.subr.bf16.mxu0 0
    %1401 = vmatpush1.bf16.msra.mxu0 0
    %1402 = vmatprep.subr.bf16.mxu0 0
    %1403 = vmatpush1.bf16.msra.mxu0 0
    %1404 = vmatprep.subr.bf16.mxu0 0
    %1405 = vmatpush1.bf16.msra.mxu0 0
    %1406 = vmatprep.mubr.bf16.mxu0 0
    %1407 = vmatmul.mubr.bf16.gmra.mrb[0].mxu0 %v1332
    %v1408 = vpop.f32.mrb[0].mxu0
    %v1409 = vadd.f32 0.0, %v1408
    %v1410 = vpop.f32.mrb[0].mxu0
    %v1411 = vadd.f32 0.0, %v1410
    %v1412 = vpop.f32.mrb[0].mxu0
    %v1413 = vpop.f32.mrb[0].mxu0
    %1414 = vdwg.mxu0
    %v1415 = vadd.f32 %v325, %v1368
    %v1416 = vadd.f32 %v326, %v1370
    %v1417 = vadd.f32 %v327, %v1409
    %v1418 = vadd.f32 %v328, %v1411
    %v1419 = vtanh.pop %v1415
    %v1420 = vtanh.pop %v1416
    %v1421 = vtanh.pop %v1417
    %v1422 = vtanh.pop %v1418
    %v1423 = vmul.f32 %v1419, 0.5
    %v1424 = vadd.f32 %v1423, 0.5
    %v1425 = vmul.f32 %v1420, 0.5
    %v1426 = vadd.f32 %v1425, 0.5
    %v1427 = vmul.f32 %v1422, 0.5
    %v1428 = vadd.f32 %v1427, 0.5
    %v1429 = vmul.f32 %v1426, %v1329
    %v1430 = vmul.f32 %v1424, %v1421
    %v1431 = vadd.f32 %v1429, %v1430
    %v1432 = vtanh.pop %v1431
    %v1433 = vmul.f32 %v1428, %v1432
    %v1434 = vpack.c.bf16 %v1433, %v1433
    %1435 = vmatprep.subr.bf16.mxu0 %v454
    %1436 = vmatpush1.bf16.msra.mxu0 %v453
    %1437 = vmatprep.subr.bf16.mxu0 %v458
    %1438 = vmatpush1.bf16.msra.mxu0 %v457
    %1439 = vmatprep.subr.bf16.mxu0 %v462
    %1440 = vmatpush1.bf16.msra.mxu0 %v461
    %1441 = vmatprep.subr.bf16.mxu0 %v466
    %1442 = vmatpush1.bf16.msra.mxu0 %v465
    %1443 = vmatprep.subr.bf16.mxu0 %v470
    %1444 = vmatpush1.bf16.msra.mxu0 %v469
    %1445 = vmatprep.subr.bf16.mxu0 %v474
    %1446 = vmatpush1.bf16.msra.mxu0 %v473
    %1447 = vmatprep.subr.bf16.mxu0 %v478
    %1448 = vmatpush1.bf16.msra.mxu0 %v477
    %1449 = vmatprep.subr.bf16.mxu0 %v482
    %1450 = vmatpush1.bf16.msra.mxu0 %v481
    %1451 = vmatprep.subr.bf16.mxu0 0
    %1452 = vmatpush1.bf16.msra.mxu0 0
    %1453 = vmatprep.subr.bf16.mxu0 0
    %1454 = vmatpush1.bf16.msra.mxu0 0
    %1455 = vmatprep.subr.bf16.mxu0 0
    %1456 = vmatpush1.bf16.msra.mxu0 0
    %1457 = vmatprep.subr.bf16.mxu0 0
    %1458 = vmatpush1.bf16.msra.mxu0 0
    %1459 = vmatprep.subr.bf16.mxu0 0
    %1460 = vmatpush1.bf16.msra.mxu0 0
    %1461 = vmatprep.subr.bf16.mxu0 0
    %1462 = vmatpush1.bf16.msra.mxu0 0
    %1463 = vmatprep.subr.bf16.mxu0 0
    %1464 = vmatpush1.bf16.msra.mxu0 0
    %1465 = vmatprep.subr.bf16.mxu0 0
    %1466 = vmatpush1.bf16.msra.mxu0 0
    %1467 = vmatprep.mubr.bf16.mxu0 0
    %1468 = vmatmul.mubr.bf16.gmra.mrb[0].mxu0 %v1434
    %v1469 = vpop.f32.mrb[0].mxu0
    %v1470 = vadd.f32 0.0, %v1469
    %v1471 = vpop.f32.mrb[0].mxu0
    %v1472 = vadd.f32 0.0, %v1471
    %v1473 = vpop.f32.mrb[0].mxu0
    %v1474 = vpop.f32.mrb[0].mxu0
    %1475 = vdwg.mxu0
    %1476 = vmatprep.subr.bf16.mxu0 %v456
    %1477 = vmatpush1.bf16.msra.mxu0 %v455
    %1478 = vmatprep.subr.bf16.mxu0 %v460
    %1479 = vmatpush1.bf16.msra.mxu0 %v459
    %1480 = vmatprep.subr.bf16.mxu0 %v464
    %1481 = vmatpush1.bf16.msra.mxu0 %v463
    %1482 = vmatprep.subr.bf16.mxu0 %v468
    %1483 = vmatpush1.bf16.msra.mxu0 %v467
    %1484 = vmatprep.subr.bf16.mxu0 %v472
    %1485 = vmatpush1.bf16.msra.mxu0 %v471
    %1486 = vmatprep.subr.bf16.mxu0 %v476
    %1487 = vmatpush1.bf16.msra.mxu0 %v475
    %1488 = vmatprep.subr.bf16.mxu0 %v480
    %1489 = vmatpush1.bf16.msra.mxu0 %v479
    %1490 = vmatprep.subr.bf16.mxu0 %v484
    %1491 = vmatpush1.bf16.msra.mxu0 %v483
    %1492 = vmatprep.subr.bf16.mxu0 0
    %1493 = vmatpush1.bf16.msra.mxu0 0
    %1494 = vmatprep.subr.bf16.mxu0 0
    %1495 = vmatpush1.bf16.msra.mxu0 0
    %1496 = vmatprep.subr.bf16.mxu0 0
    %1497 = vmatpush1.bf16.msra.mxu0 0
    %1498 = vmatprep.subr.bf16.mxu0 0
    %1499 = vmatpush1.bf16.msra.mxu0 0
    %1500 = vmatprep.subr.bf16.mxu0 0
    %1501 = vmatpush1.bf16.msra.mxu0 0
    %1502 = vmatprep.subr.bf16.mxu0 0
    %1503 = vmatpush1.bf16.msra.mxu0 0
    %1504 = vmatprep.subr.bf16.mxu0 0
    %1505 = vmatpush1.bf16.msra.mxu0 0
    %1506 = vmatprep.subr.bf16.mxu0 0
    %1507 = vmatpush1.bf16.msra.mxu0 0
    %1508 = vmatprep.mubr.bf16.mxu0 0
    %1509 = vmatmul.mubr.bf16.gmra.mrb[0].mxu0 %v1434
    %v1510 = vpop.f32.mrb[0].mxu0
    %v1511 = vadd.f32 0.0, %v1510
    %v1512 = vpop.f32.mrb[0].mxu0
    %v1513 = vadd.f32 0.0, %v1512
    %v1514 = vpop.f32.mrb[0].mxu0
    %v1515 = vpop.f32.mrb[0].mxu0
    %1516 = vdwg.mxu0
    %v1517 = vadd.f32 %v329, %v1470
    %v1518 = vadd.f32 %v330, %v1472
    %v1519 = vadd.f32 %v331, %v1511
    %v1520 = vadd.f32 %v332, %v1513
    %v1521 = vtanh.pop %v1517
    %v1522 = vtanh.pop %v1518
    %v1523 = vtanh.pop %v1519
    %v1524 = vtanh.pop %v1520
    %v1525 = vmul.f32 %v1521, 0.5
    %v1526 = vadd.f32 %v1525, 0.5
    %v1527 = vmul.f32 %v1522, 0.5
    %v1528 = vadd.f32 %v1527, 0.5
    %v1529 = vmul.f32 %v1524, 0.5
    %v1530 = vadd.f32 %v1529, 0.5
    %v1531 = vmul.f32 %v1528, %v1431
    %v1532 = vmul.f32 %v1526, %v1523
    %v1533 = vadd.f32 %v1531, %v1532
    %v1534 = vtanh.pop %v1533
    %v1535 = vmul.f32 %v1530, %v1534
    %v1536 = vpack.c.bf16 %v1535, %v1535
    %1537 = vmatprep.subr.bf16.mxu0 %v454
    %1538 = vmatpush1.bf16.msra.mxu0 %v453
    %1539 = vmatprep.subr.bf16.mxu0 %v458
    %1540 = vmatpush1.bf16.msra.mxu0 %v457
    %1541 = vmatprep.subr.bf16.mxu0 %v462
    %1542 = vmatpush1.bf16.msra.mxu0 %v461
    %1543 = vmatprep.subr.bf16.mxu0 %v466
    %1544 = vmatpush1.bf16.msra.mxu0 %v465
    %1545 = vmatprep.subr.bf16.mxu0 %v470
    %1546 = vmatpush1.bf16.msra.mxu0 %v469
    %1547 = vmatprep.subr.bf16.mxu0 %v474
    %1548 = vmatpush1.bf16.msra.mxu0 %v473
    %1549 = vmatprep.subr.bf16.mxu0 %v478
    %1550 = vmatpush1.bf16.msra.mxu0 %v477
    %1551 = vmatprep.subr.bf16.mxu0 %v482
    %1552 = vmatpush1.bf16.msra.mxu0 %v481
    %1553 = vmatprep.subr.bf16.mxu0 0
    %1554 = vmatpush1.bf16.msra.mxu0 0
    %1555 = vmatprep.subr.bf16.mxu0 0
    %1556 = vmatpush1.bf16.msra.mxu0 0
    %1557 = vmatprep.subr.bf16.mxu0 0
    %1558 = vmatpush1.bf16.msra.mxu0 0
    %1559 = vmatprep.subr.bf16.mxu0 0
    %1560 = vmatpush1.bf16.msra.mxu0 0
    %1561 = vmatprep.subr.bf16.mxu0 0
    %1562 = vmatpush1.bf16.msra.mxu0 0
    %1563 = vmatprep.subr.bf16.mxu0 0
    %1564 = vmatpush1.bf16.msra.mxu0 0
    %1565 = vmatprep.subr.bf16.mxu0 0
    %1566 = vmatpush1.bf16.msra.mxu0 0
    %1567 = vmatprep.subr.bf16.mxu0 0
    %1568 = vmatpush1.bf16.msra.mxu0 0
    %1569 = vmatprep.mubr.bf16.mxu0 0
    %1570 = vmatmul.mubr.bf16.gmra.mrb[0].mxu0 %v1536
    %v1571 = vpop.f32.mrb[0].mxu0
    %v1572 = vadd.f32 0.0, %v1571
    %v1573 = vpop.f32.mrb[0].mxu0
    %v1574 = vadd.f32 0.0, %v1573
    %v1575 = vpop.f32.mrb[0].mxu0
    %v1576 = vpop.f32.mrb[0].mxu0
    %1577 = vdwg.mxu0
    %1578 = vmatprep.subr.bf16.mxu0 %v456
    %1579 = vmatpush1.bf16.msra.mxu0 %v455
    %1580 = vmatprep.subr.bf16.mxu0 %v460
    %1581 = vmatpush1.bf16.msra.mxu0 %v459
    %1582 = vmatprep.subr.bf16.mxu0 %v464
    %1583 = vmatpush1.bf16.msra.mxu0 %v463
    %1584 = vmatprep.subr.bf16.mxu0 %v468
    %1585 = vmatpush1.bf16.msra.mxu0 %v467
    %1586 = vmatprep.subr.bf16.mxu0 %v472
    %1587 = vmatpush1.bf16.msra.mxu0 %v471
    %1588 = vmatprep.subr.bf16.mxu0 %v476
    %1589 = vmatpush1.bf16.msra.mxu0 %v475
    %1590 = vmatprep.subr.bf16.mxu0 %v480
    %1591 = vmatpush1.bf16.msra.mxu0 %v479
    %1592 = vmatprep.subr.bf16.mxu0 %v484
    %1593 = vmatpush1.bf16.msra.mxu0 %v483
    %1594 = vmatprep.subr.bf16.mxu0 0
    %1595 = vmatpush1.bf16.msra.mxu0 0
    %1596 = vmatprep.subr.bf16.mxu0 0
    %1597 = vmatpush1.bf16.msra.mxu0 0
    %1598 = vmatprep.subr.bf16.mxu0 0
    %1599 = vmatpush1.bf16.msra.mxu0 0
    %1600 = vmatprep.subr.bf16.mxu0 0
    %1601 = vmatpush1.bf16.msra.mxu0 0
    %1602 = vmatprep.subr.bf16.mxu0 0
    %1603 = vmatpush1.bf16.msra.mxu0 0
    %1604 = vmatprep.subr.bf16.mxu0 0
    %1605 = vmatpush1.bf16.msra.mxu0 0
    %1606 = vmatprep.subr.bf16.mxu0 0
    %1607 = vmatpush1.bf16.msra.mxu0 0
    %1608 = vmatprep.subr.bf16.mxu0 0
    %1609 = vmatpush1.bf16.msra.mxu0 0
    %1610 = vmatprep.mubr.bf16.mxu0 0
    %1611 = vmatmul.mubr.bf16.gmra.mrb[0].mxu0 %v1536
    %v1612 = vpop.f32.mrb[0].mxu0
    %v1613 = vadd.f32 0.0, %v1612
    %v1614 = vpop.f32.mrb[0].mxu0
    %v1615 = vadd.f32 0.0, %v1614
    %v1616 = vpop.f32.mrb[0].mxu0
    %v1617 = vpop.f32.mrb[0].mxu0
    %1618 = vdwg.mxu0
    %v1619 = vadd.f32 %v333, %v1572
    %v1620 = vadd.f32 %v334, %v1574
    %v1621 = vadd.f32 %v335, %v1613
    %v1622 = vadd.f32 %v336, %v1615
    %v1623 = vtanh.pop %v1619
    %v1624 = vtanh.pop %v1620
    %v1625 = vtanh.pop %v1621
    %v1626 = vtanh.pop %v1622
    %v1627 = vmul.f32 %v1623, 0.5
    %v1628 = vadd.f32 %v1627, 0.5
    %v1629 = vmul.f32 %v1624, 0.5
    %v1630 = vadd.f32 %v1629, 0.5
    %v1631 = vmul.f32 %v1626, 0.5
    %v1632 = vadd.f32 %v1631, 0.5
    %v1633 = vmul.f32 %v1630, %v1533
    %v1634 = vmul.f32 %v1628, %v1625
    %v1635 = vadd.f32 %v1633, %v1634
    %v1636 = vtanh.pop %v1635
    %v1637 = vmul.f32 %v1632, %v1636
    %v1638 = vpack.c.bf16 %v1637, %v1637
    %1639 = vmatprep.subr.bf16.mxu0 %v454
    %1640 = vmatpush1.bf16.msra.mxu0 %v453
    %1641 = vmatprep.subr.bf16.mxu0 %v458
    %1642 = vmatpush1.bf16.msra.mxu0 %v457
    %1643 = vmatprep.subr.bf16.mxu0 %v462
    %1644 = vmatpush1.bf16.msra.mxu0 %v461
    %1645 = vmatprep.subr.bf16.mxu0 %v466
    %1646 = vmatpush1.bf16.msra.mxu0 %v465
    %1647 = vmatprep.subr.bf16.mxu0 %v470
    %1648 = vmatpush1.bf16.msra.mxu0 %v469
    %1649 = vmatprep.subr.bf16.mxu0 %v474
    %1650 = vmatpush1.bf16.msra.mxu0 %v473
    %1651 = vmatprep.subr.bf16.mxu0 %v478
    %1652 = vmatpush1.bf16.msra.mxu0 %v477
    %1653 = vmatprep.subr.bf16.mxu0 %v482
    %1654 = vmatpush1.bf16.msra.mxu0 %v481
    %1655 = vmatprep.subr.bf16.mxu0 0
    %1656 = vmatpush1.bf16.msra.mxu0 0
    %1657 = vmatprep.subr.bf16.mxu0 0
    %1658 = vmatpush1.bf16.msra.mxu0 0
    %1659 = vmatprep.subr.bf16.mxu0 0
    %1660 = vmatpush1.bf16.msra.mxu0 0
    %1661 = vmatprep.subr.bf16.mxu0 0
    %1662 = vmatpush1.bf16.msra.mxu0 0
    %1663 = vmatprep.subr.bf16.mxu0 0
    %1664 = vmatpush1.bf16.msra.mxu0 0
    %1665 = vmatprep.subr.bf16.mxu0 0
    %1666 = vmatpush1.bf16.msra.mxu0 0
    %1667 = vmatprep.subr.bf16.mxu0 0
    %1668 = vmatpush1.bf16.msra.mxu0 0
    %1669 = vmatprep.subr.bf16.mxu0 0
    %1670 = vmatpush1.bf16.msra.mxu0 0
    %1671 = vmatprep.mubr.bf16.mxu0 0
    %1672 = vmatmul.mubr.bf16.gmra.mrb[0].mxu0 %v1638
    %v1673 = vpop.f32.mrb[0].mxu0
    %v1674 = vadd.f32 0.0, %v1673
    %v1675 = vpop.f32.mrb[0].mxu0
    %v1676 = vadd.f32 0.0, %v1675
    %v1677 = vpop.f32.mrb[0].mxu0
    %v1678 = vpop.f32.mrb[0].mxu0
    %1679 = vdwg.mxu0
    %1680 = vmatprep.subr.bf16.mxu0 %v456
    %1681 = vmatpush1.bf16.msra.mxu0 %v455
    %1682 = vmatprep.subr.bf16.mxu0 %v460
    %1683 = vmatpush1.bf16.msra.mxu0 %v459
    %1684 = vmatprep.subr.bf16.mxu0 %v464
    %1685 = vmatpush1.bf16.msra.mxu0 %v463
    %1686 = vmatprep.subr.bf16.mxu0 %v468
    %1687 = vmatpush1.bf16.msra.mxu0 %v467
    %1688 = vmatprep.subr.bf16.mxu0 %v472
    %1689 = vmatpush1.bf16.msra.mxu0 %v471
    %1690 = vmatprep.subr.bf16.mxu0 %v476
    %1691 = vmatpush1.bf16.msra.mxu0 %v475
    %1692 = vmatprep.subr.bf16.mxu0 %v480
    %1693 = vmatpush1.bf16.msra.mxu0 %v479
    %1694 = vmatprep.subr.bf16.mxu0 %v484
    %1695 = vmatpush1.bf16.msra.mxu0 %v483
    %1696 = vmatprep.subr.bf16.mxu0 0
    %1697 = vmatpush1.bf16.msra.mxu0 0
    %1698 = vmatprep.subr.bf16.mxu0 0
    %1699 = vmatpush1.bf16.msra.mxu0 0
    %1700 = vmatprep.subr.bf16.mxu0 0
    %1701 = vmatpush1.bf16.msra.mxu0 0
    %1702 = vmatprep.subr.bf16.mxu0 0
    %1703 = vmatpush1.bf16.msra.mxu0 0
    %1704 = vmatprep.subr.bf16.mxu0 0
    %1705 = vmatpush1.bf16.msra.mxu0 0
    %1706 = vmatprep.subr.bf16.mxu0 0
    %1707 = vmatpush1.bf16.msra.mxu0 0
    %1708 = vmatprep.subr.bf16.mxu0 0
    %1709 = vmatpush1.bf16.msra.mxu0 0
    %1710 = vmatprep.subr.bf16.mxu0 0
    %1711 = vmatpush1.bf16.msra.mxu0 0
    %1712 = vmatprep.mubr.bf16.mxu0 0
    %1713 = vmatmul.mubr.bf16.gmra.mrb[0].mxu0 %v1638
    %v1714 = vpop.f32.mrb[0].mxu0
    %v1715 = vadd.f32 0.0, %v1714
    %v1716 = vpop.f32.mrb[0].mxu0
    %v1717 = vadd.f32 0.0, %v1716
    %v1718 = vpop.f32.mrb[0].mxu0
    %v1719 = vpop.f32.mrb[0].mxu0
    %1720 = vdwg.mxu0
    %v1721 = vadd.f32 %v337, %v1674
    %v1722 = vadd.f32 %v338, %v1676
    %v1723 = vadd.f32 %v339, %v1715
    %v1724 = vadd.f32 %v340, %v1717
    %v1725 = vtanh.pop %v1721
    %v1726 = vtanh.pop %v1722
    %v1727 = vtanh.pop %v1723
    %v1728 = vtanh.pop %v1724
    %v1729 = vmul.f32 %v1725, 0.5
    %v1730 = vadd.f32 %v1729, 0.5
    %v1731 = vmul.f32 %v1726, 0.5
    %v1732 = vadd.f32 %v1731, 0.5
    %v1733 = vmul.f32 %v1728, 0.5
    %v1734 = vadd.f32 %v1733, 0.5
    %v1735 = vmul.f32 %v1732, %v1635
    %v1736 = vmul.f32 %v1730, %v1727
    %v1737 = vadd.f32 %v1735, %v1736
    %v1738 = vtanh.pop %v1737
    %v1739 = vmul.f32 %v1734, %v1738
    %v1740 = vpack.c.bf16 %v1739, %v1739
    %1741 = vmatprep.subr.bf16.mxu0 %v454
    %1742 = vmatpush1.bf16.msra.mxu0 %v453
    %1743 = vmatprep.subr.bf16.mxu0 %v458
    %1744 = vmatpush1.bf16.msra.mxu0 %v457
    %1745 = vmatprep.subr.bf16.mxu0 %v462
    %1746 = vmatpush1.bf16.msra.mxu0 %v461
    %1747 = vmatprep.subr.bf16.mxu0 %v466
    %1748 = vmatpush1.bf16.msra.mxu0 %v465
    %1749 = vmatprep.subr.bf16.mxu0 %v470
    %1750 = vmatpush1.bf16.msra.mxu0 %v469
    %1751 = vmatprep.subr.bf16.mxu0 %v474
    %1752 = vmatpush1.bf16.msra.mxu0 %v473
    %1753 = vmatprep.subr.bf16.mxu0 %v478
    %1754 = vmatpush1.bf16.msra.mxu0 %v477
    %1755 = vmatprep.subr.bf16.mxu0 %v482
    %1756 = vmatpush1.bf16.msra.mxu0 %v481
    %1757 = vmatprep.subr.bf16.mxu0 0
    %1758 = vmatpush1.bf16.msra.mxu0 0
    %1759 = vmatprep.subr.bf16.mxu0 0
    %1760 = vmatpush1.bf16.msra.mxu0 0
    %1761 = vmatprep.subr.bf16.mxu0 0
    %1762 = vmatpush1.bf16.msra.mxu0 0
    %1763 = vmatprep.subr.bf16.mxu0 0
    %1764 = vmatpush1.bf16.msra.mxu0 0
    %1765 = vmatprep.subr.bf16.mxu0 0
    %1766 = vmatpush1.bf16.msra.mxu0 0
    %1767 = vmatprep.subr.bf16.mxu0 0
    %1768 = vmatpush1.bf16.msra.mxu0 0
    %1769 = vmatprep.subr.bf16.mxu0 0
    %1770 = vmatpush1.bf16.msra.mxu0 0
    %1771 = vmatprep.subr.bf16.mxu0 0
    %1772 = vmatpush1.bf16.msra.mxu0 0
    %1773 = vmatprep.mubr.bf16.mxu0 0
    %1774 = vmatmul.mubr.bf16.gmra.mrb[0].mxu0 %v1740
    %v1775 = vpop.f32.mrb[0].mxu0
    %v1776 = vadd.f32 0.0, %v1775
    %v1777 = vpop.f32.mrb[0].mxu0
    %v1778 = vadd.f32 0.0, %v1777
    %v1779 = vpop.f32.mrb[0].mxu0
    %v1780 = vpop.f32.mrb[0].mxu0
    %1781 = vdwg.mxu0
    %1782 = vmatprep.subr.bf16.mxu0 %v456
    %1783 = vmatpush1.bf16.msra.mxu0 %v455
    %1784 = vmatprep.subr.bf16.mxu0 %v460
    %1785 = vmatpush1.bf16.msra.mxu0 %v459
    %1786 = vmatprep.subr.bf16.mxu0 %v464
    %1787 = vmatpush1.bf16.msra.mxu0 %v463
    %1788 = vmatprep.subr.bf16.mxu0 %v468
    %1789 = vmatpush1.bf16.msra.mxu0 %v467
    %1790 = vmatprep.subr.bf16.mxu0 %v472
    %1791 = vmatpush1.bf16.msra.mxu0 %v471
    %1792 = vmatprep.subr.bf16.mxu0 %v476
    %1793 = vmatpush1.bf16.msra.mxu0 %v475
    %1794 = vmatprep.subr.bf16.mxu0 %v480
    %1795 = vmatpush1.bf16.msra.mxu0 %v479
    %1796 = vmatprep.subr.bf16.mxu0 %v484
    %1797 = vmatpush1.bf16.msra.mxu0 %v483
    %1798 = vmatprep.subr.bf16.mxu0 0
    %1799 = vmatpush1.bf16.msra.mxu0 0
    %1800 = vmatprep.subr.bf16.mxu0 0
    %1801 = vmatpush1.bf16.msra.mxu0 0
    %1802 = vmatprep.subr.bf16.mxu0 0
    %1803 = vmatpush1.bf16.msra.mxu0 0
    %1804 = vmatprep.subr.bf16.mxu0 0
    %1805 = vmatpush1.bf16.msra.mxu0 0
    %1806 = vmatprep.subr.bf16.mxu0 0
    %1807 = vmatpush1.bf16.msra.mxu0 0
    %1808 = vmatprep.subr.bf16.mxu0 0
    %1809 = vmatpush1.bf16.msra.mxu0 0
    %1810 = vmatprep.subr.bf16.mxu0 0
    %1811 = vmatpush1.bf16.msra.mxu0 0
    %1812 = vmatprep.subr.bf16.mxu0 0
    %1813 = vmatpush1.bf16.msra.mxu0 0
    %1814 = vmatprep.mubr.bf16.mxu0 0
    %1815 = vmatmul.mubr.bf16.gmra.mrb[0].mxu0 %v1740
    %v1816 = vpop.f32.mrb[0].mxu0
    %v1817 = vadd.f32 0.0, %v1816
    %v1818 = vpop.f32.mrb[0].mxu0
    %v1819 = vadd.f32 0.0, %v1818
    %v1820 = vpop.f32.mrb[0].mxu0
    %v1821 = vpop.f32.mrb[0].mxu0
    %1822 = vdwg.mxu0
    %v1823 = vadd.f32 %v341, %v1776
    %v1824 = vadd.f32 %v342, %v1778
    %v1825 = vadd.f32 %v343, %v1817
    %v1826 = vadd.f32 %v344, %v1819
    %v1827 = vtanh.pop %v1823
    %v1828 = vtanh.pop %v1824
    %v1829 = vtanh.pop %v1825
    %v1830 = vtanh.pop %v1826
    %v1831 = vmul.f32 %v1827, 0.5
    %v1832 = vadd.f32 %v1831, 0.5
    %v1833 = vmul.f32 %v1828, 0.5
    %v1834 = vadd.f32 %v1833, 0.5
    %v1835 = vmul.f32 %v1830, 0.5
    %v1836 = vadd.f32 %v1835, 0.5
    %v1837 = vmul.f32 %v1834, %v1737
    %v1838 = vmul.f32 %v1832, %v1829
    %v1839 = vadd.f32 %v1837, %v1838
    %v1840 = vtanh.pop %v1839
    %v1841 = vmul.f32 %v1836, %v1840
    %v1842 = vpack.c.bf16 %v1841, %v1841
    %1843 = vmatprep.subr.bf16.mxu0 %v454
    %1844 = vmatpush1.bf16.msra.mxu0 %v453
    %1845 = vmatprep.subr.bf16.mxu0 %v458
    %1846 = vmatpush1.bf16.msra.mxu0 %v457
    %1847 = vmatprep.subr.bf16.mxu0 %v462
    %1848 = vmatpush1.bf16.msra.mxu0 %v461
    %1849 = vmatprep.subr.bf16.mxu0 %v466
    %1850 = vmatpush1.bf16.msra.mxu0 %v465
    %1851 = vmatprep.subr.bf16.mxu0 %v470
    %1852 = vmatpush1.bf16.msra.mxu0 %v469
    %1853 = vmatprep.subr.bf16.mxu0 %v474
    %1854 = vmatpush1.bf16.msra.mxu0 %v473
    %1855 = vmatprep.subr.bf16.mxu0 %v478
    %1856 = vmatpush1.bf16.msra.mxu0 %v477
    %1857 = vmatprep.subr.bf16.mxu0 %v482
    %1858 = vmatpush1.bf16.msra.mxu0 %v481
    %1859 = vmatprep.subr.bf16.mxu0 0
    %1860 = vmatpush1.bf16.msra.mxu0 0
    %1861 = vmatprep.subr.bf16.mxu0 0
    %1862 = vmatpush1.bf16.msra.mxu0 0
    %1863 = vmatprep.subr.bf16.mxu0 0
    %1864 = vmatpush1.bf16.msra.mxu0 0
    %1865 = vmatprep.subr.bf16.mxu0 0
    %1866 = vmatpush1.bf16.msra.mxu0 0
    %1867 = vmatprep.subr.bf16.mxu0 0
    %1868 = vmatpush1.bf16.msra.mxu0 0
    %1869 = vmatprep.subr.bf16.mxu0 0
    %1870 = vmatpush1.bf16.msra.mxu0 0
    %1871 = vmatprep.subr.bf16.mxu0 0
    %1872 = vmatpush1.bf16.msra.mxu0 0
    %1873 = vmatprep.subr.bf16.mxu0 0
    %1874 = vmatpush1.bf16.msra.mxu0 0
    %1875 = vmatprep.mubr.bf16.mxu0 0
    %1876 = vmatmul.mubr.bf16.gmra.mrb[0].mxu0 %v1842
    %v1877 = vpop.f32.mrb[0].mxu0
    %v1878 = vadd.f32 0.0, %v1877
    %v1879 = vpop.f32.mrb[0].mxu0
    %v1880 = vadd.f32 0.0, %v1879
    %v1881 = vpop.f32.mrb[0].mxu0
    %v1882 = vpop.f32.mrb[0].mxu0
    %1883 = vdwg.mxu0
    %1884 = vmatprep.subr.bf16.mxu0 %v456
    %1885 = vmatpush1.bf16.msra.mxu0 %v455
    %1886 = vmatprep.subr.bf16.mxu0 %v460
    %1887 = vmatpush1.bf16.msra.mxu0 %v459
    %1888 = vmatprep.subr.bf16.mxu0 %v464
    %1889 = vmatpush1.bf16.msra.mxu0 %v463
    %1890 = vmatprep.subr.bf16.mxu0 %v468
    %1891 = vmatpush1.bf16.msra.mxu0 %v467
    %1892 = vmatprep.subr.bf16.mxu0 %v472
    %1893 = vmatpush1.bf16.msra.mxu0 %v471
    %1894 = vmatprep.subr.bf16.mxu0 %v476
    %1895 = vmatpush1.bf16.msra.mxu0 %v475
    %1896 = vmatprep.subr.bf16.mxu0 %v480
    %1897 = vmatpush1.bf16.msra.mxu0 %v479
    %1898 = vmatprep.subr.bf16.mxu0 %v484
    %1899 = vmatpush1.bf16.msra.mxu0 %v483
    %1900 = vmatprep.subr.bf16.mxu0 0
    %1901 = vmatpush1.bf16.msra.mxu0 0
    %1902 = vmatprep.subr.bf16.mxu0 0
    %1903 = vmatpush1.bf16.msra.mxu0 0
    %1904 = vmatprep.subr.bf16.mxu0 0
    %1905 = vmatpush1.bf16.msra.mxu0 0
    %1906 = vmatprep.subr.bf16.mxu0 0
    %1907 = vmatpush1.bf16.msra.mxu0 0
    %1908 = vmatprep.subr.bf16.mxu0 0
    %1909 = vmatpush1.bf16.msra.mxu0 0
    %1910 = vmatprep.subr.bf16.mxu0 0
    %1911 = vmatpush1.bf16.msra.mxu0 0
    %1912 = vmatprep.subr.bf16.mxu0 0
    %1913 = vmatpush1.bf16.msra.mxu0 0
    %1914 = vmatprep.subr.bf16.mxu0 0
    %1915 = vmatpush1.bf16.msra.mxu0 0
    %1916 = vmatprep.mubr.bf16.mxu0 0
    %1917 = vmatmul.mubr.bf16.gmra.mrb[0].mxu0 %v1842
    %v1918 = vpop.f32.mrb[0].mxu0
    %v1919 = vadd.f32 0.0, %v1918
    %v1920 = vpop.f32.mrb[0].mxu0
    %v1921 = vadd.f32 0.0, %v1920
    %v1922 = vpop.f32.mrb[0].mxu0
    %v1923 = vpop.f32.mrb[0].mxu0
    %1924 = vdwg.mxu0
    %v1925 = vadd.f32 %v345, %v1878
    %v1926 = vadd.f32 %v346, %v1880
    %v1927 = vadd.f32 %v347, %v1919
    %v1928 = vadd.f32 %v348, %v1921
    %v1929 = vtanh.pop %v1925
    %v1930 = vtanh.pop %v1926
    %v1931 = vtanh.pop %v1927
    %v1932 = vtanh.pop %v1928
    %v1933 = vmul.f32 %v1929, 0.5
    %v1934 = vadd.f32 %v1933, 0.5
    %v1935 = vmul.f32 %v1930, 0.5
    %v1936 = vadd.f32 %v1935, 0.5
    %v1937 = vmul.f32 %v1932, 0.5
    %v1938 = vadd.f32 %v1937, 0.5
    %v1939 = vmul.f32 %v1936, %v1839
    %v1940 = vmul.f32 %v1934, %v1931
    %v1941 = vadd.f32 %v1939, %v1940
    %v1942 = vtanh.pop %v1941
    %v1943 = vmul.f32 %v1938, %v1942
    %v1944 = vpack.c.bf16 %v1943, %v1943
    %1945 = vmatprep.subr.bf16.mxu0 %v454
    %1946 = vmatpush1.bf16.msra.mxu0 %v453
    %1947 = vmatprep.subr.bf16.mxu0 %v458
    %1948 = vmatpush1.bf16.msra.mxu0 %v457
    %1949 = vmatprep.subr.bf16.mxu0 %v462
    %1950 = vmatpush1.bf16.msra.mxu0 %v461
    %1951 = vmatprep.subr.bf16.mxu0 %v466
    %1952 = vmatpush1.bf16.msra.mxu0 %v465
    %1953 = vmatprep.subr.bf16.mxu0 %v470
    %1954 = vmatpush1.bf16.msra.mxu0 %v469
    %1955 = vmatprep.subr.bf16.mxu0 %v474
    %1956 = vmatpush1.bf16.msra.mxu0 %v473
    %1957 = vmatprep.subr.bf16.mxu0 %v478
    %1958 = vmatpush1.bf16.msra.mxu0 %v477
    %1959 = vmatprep.subr.bf16.mxu0 %v482
    %1960 = vmatpush1.bf16.msra.mxu0 %v481
    %1961 = vmatprep.subr.bf16.mxu0 0
    %1962 = vmatpush1.bf16.msra.mxu0 0
    %1963 = vmatprep.subr.bf16.mxu0 0
    %1964 = vmatpush1.bf16.msra.mxu0 0
    %1965 = vmatprep.subr.bf16.mxu0 0
    %1966 = vmatpush1.bf16.msra.mxu0 0
    %1967 = vmatprep.subr.bf16.mxu0 0
    %1968 = vmatpush1.bf16.msra.mxu0 0
    %1969 = vmatprep.subr.bf16.mxu0 0
    %1970 = vmatpush1.bf16.msra.mxu0 0
    %1971 = vmatprep.subr.bf16.mxu0 0
    %1972 = vmatpush1.bf16.msra.mxu0 0
    %1973 = vmatprep.subr.bf16.mxu0 0
    %1974 = vmatpush1.bf16.msra.mxu0 0
    %1975 = vmatprep.subr.bf16.mxu0 0
    %1976 = vmatpush1.bf16.msra.mxu0 0
    %1977 = vmatprep.mubr.bf16.mxu0 0
    %1978 = vmatmul.mubr.bf16.gmra.mrb[0].mxu0 %v1944
    %v1979 = vpop.f32.mrb[0].mxu0
    %v1980 = vadd.f32 0.0, %v1979
    %v1981 = vpop.f32.mrb[0].mxu0
    %v1982 = vadd.f32 0.0, %v1981
    %v1983 = vpop.f32.mrb[0].mxu0
    %v1984 = vpop.f32.mrb[0].mxu0
    %1985 = vdwg.mxu0
    %1986 = vmatprep.subr.bf16.mxu0 %v456
    %1987 = vmatpush1.bf16.msra.mxu0 %v455
    %1988 = vmatprep.subr.bf16.mxu0 %v460
    %1989 = vmatpush1.bf16.msra.mxu0 %v459
    %1990 = vmatprep.subr.bf16.mxu0 %v464
    %1991 = vmatpush1.bf16.msra.mxu0 %v463
    %1992 = vmatprep.subr.bf16.mxu0 %v468
    %1993 = vmatpush1.bf16.msra.mxu0 %v467
    %1994 = vmatprep.subr.bf16.mxu0 %v472
    %1995 = vmatpush1.bf16.msra.mxu0 %v471
    %1996 = vmatprep.subr.bf16.mxu0 %v476
    %1997 = vmatpush1.bf16.msra.mxu0 %v475
    %1998 = vmatprep.subr.bf16.mxu0 %v480
    %1999 = vmatpush1.bf16.msra.mxu0 %v479
    %2000 = vmatprep.subr.bf16.mxu0 %v484
    %2001 = vmatpush1.bf16.msra.mxu0 %v483
    %2002 = vmatprep.subr.bf16.mxu0 0
    %2003 = vmatpush1.bf16.msra.mxu0 0
    %2004 = vmatprep.subr.bf16.mxu0 0
    %2005 = vmatpush1.bf16.msra.mxu0 0
    %2006 = vmatprep.subr.bf16.mxu0 0
    %2007 = vmatpush1.bf16.msra.mxu0 0
    %2008 = vmatprep.subr.bf16.mxu0 0
    %2009 = vmatpush1.bf16.msra.mxu0 0
    %2010 = vmatprep.subr.bf16.mxu0 0
    %2011 = vmatpush1.bf16.msra.mxu0 0
    %2012 = vmatprep.subr.bf16.mxu0 0
    %2013 = vmatpush1.bf16.msra.mxu0 0
    %2014 = vmatprep.subr.bf16.mxu0 0
    %2015 = vmatpush1.bf16.msra.mxu0 0
    %2016 = vmatprep.subr.bf16.mxu0 0
    %2017 = vmatpush1.bf16.msra.mxu0 0
    %2018 = vmatprep.mubr.bf16.mxu0 0
    %2019 = vmatmul.mubr.bf16.gmra.mrb[0].mxu0 %v1944
    %v2020 = vpop.f32.mrb[0].mxu0
    %v2021 = vadd.f32 0.0, %v2020
    %v2022 = vpop.f32.mrb[0].mxu0
    %v2023 = vadd.f32 0.0, %v2022
    %v2024 = vpop.f32.mrb[0].mxu0
    %v2025 = vpop.f32.mrb[0].mxu0
    %2026 = vdwg.mxu0
    %v2027 = vadd.f32 %v349, %v1980
    %v2028 = vadd.f32 %v350, %v1982
    %v2029 = vadd.f32 %v351, %v2021
    %v2030 = vadd.f32 %v352, %v2023
    %v2031 = vtanh.pop %v2027
    %v2032 = vtanh.pop %v2028
    %v2033 = vtanh.pop %v2029
    %v2034 = vtanh.pop %v2030
    %v2035 = vmul.f32 %v2031, 0.5
    %v2036 = vadd.f32 %v2035, 0.5
    %v2037 = vmul.f32 %v2032, 0.5
    %v2038 = vadd.f32 %v2037, 0.5
    %v2039 = vmul.f32 %v2034, 0.5
    %v2040 = vadd.f32 %v2039, 0.5
    %v2041 = vmul.f32 %v2038, %v1941
    %v2042 = vmul.f32 %v2036, %v2033
    %v2043 = vadd.f32 %v2041, %v2042
    %v2044 = vtanh.pop %v2043
    %v2045 = vmul.f32 %v2040, %v2044
    %v2046 = vpack.c.bf16 %v2045, %v2045
    %2047 = vmatprep.subr.bf16.mxu0 %v454
    %2048 = vmatpush1.bf16.msra.mxu0 %v453
    %2049 = vmatprep.subr.bf16.mxu0 %v458
    %2050 = vmatpush1.bf16.msra.mxu0 %v457
    %2051 = vmatprep.subr.bf16.mxu0 %v462
    %2052 = vmatpush1.bf16.msra.mxu0 %v461
    %2053 = vmatprep.subr.bf16.mxu0 %v466
    %2054 = vmatpush1.bf16.msra.mxu0 %v465
    %2055 = vmatprep.subr.bf16.mxu0 %v470
    %2056 = vmatpush1.bf16.msra.mxu0 %v469
    %2057 = vmatprep.subr.bf16.mxu0 %v474
    %2058 = vmatpush1.bf16.msra.mxu0 %v473
    %2059 = vmatprep.subr.bf16.mxu0 %v478
    %2060 = vmatpush1.bf16.msra.mxu0 %v477
    %2061 = vmatprep.subr.bf16.mxu0 %v482
    %2062 = vmatpush1.bf16.msra.mxu0 %v481
    %2063 = vmatprep.subr.bf16.mxu0 0
    %2064 = vmatpush1.bf16.msra.mxu0 0
    %2065 = vmatprep.subr.bf16.mxu0 0
    %2066 = vmatpush1.bf16.msra.mxu0 0
    %2067 = vmatprep.subr.bf16.mxu0 0
    %2068 = vmatpush1.bf16.msra.mxu0 0
    %2069 = vmatprep.subr.bf16.mxu0 0
    %2070 = vmatpush1.bf16.msra.mxu0 0
    %2071 = vmatprep.subr.bf16.mxu0 0
    %2072 = vmatpush1.bf16.msra.mxu0 0
    %2073 = vmatprep.subr.bf16.mxu0 0
    %2074 = vmatpush1.bf16.msra.mxu0 0
    %2075 = vmatprep.subr.bf16.mxu0 0
    %2076 = vmatpush1.bf16.msra.mxu0 0
    %2077 = vmatprep.subr.bf16.mxu0 0
    %2078 = vmatpush1.bf16.msra.mxu0 0
    %2079 = vmatprep.mubr.bf16.mxu0 0
    %2080 = vmatmul.mubr.bf16.gmra.mrb[0].mxu0 %v2046
    %v2081 = vpop.f32.mrb[0].mxu0
    %v2082 = vadd.f32 0.0, %v2081
    %v2083 = vpop.f32.mrb[0].mxu0
    %v2084 = vadd.f32 0.0, %v2083
    %v2085 = vpop.f32.mrb[0].mxu0
    %v2086 = vpop.f32.mrb[0].mxu0
    %2087 = vdwg.mxu0
    %2088 = vmatprep.subr.bf16.mxu0 %v456
    %2089 = vmatpush1.bf16.msra.mxu0 %v455
    %2090 = vmatprep.subr.bf16.mxu0 %v460
    %2091 = vmatpush1.bf16.msra.mxu0 %v459
    %2092 = vmatprep.subr.bf16.mxu0 %v464
    %2093 = vmatpush1.bf16.msra.mxu0 %v463
    %2094 = vmatprep.subr.bf16.mxu0 %v468
    %2095 = vmatpush1.bf16.msra.mxu0 %v467
    %2096 = vmatprep.subr.bf16.mxu0 %v472
    %2097 = vmatpush1.bf16.msra.mxu0 %v471
    %2098 = vmatprep.subr.bf16.mxu0 %v476
    %2099 = vmatpush1.bf16.msra.mxu0 %v475
    %2100 = vmatprep.subr.bf16.mxu0 %v480
    %2101 = vmatpush1.bf16.msra.mxu0 %v479
    %2102 = vmatprep.subr.bf16.mxu0 %v484
    %2103 = vmatpush1.bf16.msra.mxu0 %v483
    %2104 = vmatprep.subr.bf16.mxu0 0
    %2105 = vmatpush1.bf16.msra.mxu0 0
    %2106 = vmatprep.subr.bf16.mxu0 0
    %2107 = vmatpush1.bf16.msra.mxu0 0
    %2108 = vmatprep.subr.bf16.mxu0 0
    %2109 = vmatpush1.bf16.msra.mxu0 0
    %2110 = vmatprep.subr.bf16.mxu0 0
    %2111 = vmatpush1.bf16.msra.mxu0 0
    %2112 = vmatprep.subr.bf16.mxu0 0
    %2113 = vmatpush1.bf16.msra.mxu0 0
    %2114 = vmatprep.subr.bf16.mxu0 0
    %2115 = vmatpush1.bf16.msra.mxu0 0
    %2116 = vmatprep.subr.bf16.mxu0 0
    %2117 = vmatpush1.bf16.msra.mxu0 0
    %2118 = vmatprep.subr.bf16.mxu0 0
    %2119 = vmatpush1.bf16.msra.mxu0 0
    %2120 = vmatprep.mubr.bf16.mxu0 0
    %2121 = vmatmul.mubr.bf16.gmra.mrb[0].mxu0 %v2046
    %v2122 = vpop.f32.mrb[0].mxu0
    %v2123 = vadd.f32 0.0, %v2122
    %v2124 = vpop.f32.mrb[0].mxu0
    %v2125 = vadd.f32 0.0, %v2124
    %v2126 = vpop.f32.mrb[0].mxu0
    %v2127 = vpop.f32.mrb[0].mxu0
    %2128 = vdwg.mxu0
    %v2129 = vadd.f32 %v353, %v2082
    %v2130 = vadd.f32 %v354, %v2084
    %v2131 = vadd.f32 %v355, %v2123
    %v2132 = vadd.f32 %v356, %v2125
    %v2133 = vtanh.pop %v2129
    %v2134 = vtanh.pop %v2130
    %v2135 = vtanh.pop %v2131
    %v2136 = vtanh.pop %v2132
    %v2137 = vmul.f32 %v2133, 0.5
    %v2138 = vadd.f32 %v2137, 0.5
    %v2139 = vmul.f32 %v2134, 0.5
    %v2140 = vadd.f32 %v2139, 0.5
    %v2141 = vmul.f32 %v2136, 0.5
    %v2142 = vadd.f32 %v2141, 0.5
    %v2143 = vmul.f32 %v2140, %v2043
    %v2144 = vmul.f32 %v2138, %v2135
    %v2145 = vadd.f32 %v2143, %v2144
    %v2146 = vtanh.pop %v2145
    %v2147 = vmul.f32 %v2142, %v2146
    %v2148 = vld [vmem:[%s4] sm:$0xff]
    %v2149 = vld [vmem:[%s4 + $0x8] sm:$0xff]
    %v2150 = vld [vmem:[%s4 + $0x10] sm:$0xff]
    %v2151 = vld [vmem:[%s4 + $0x18] sm:$0xff]
    %v2152 = vld [vmem:[%s4 + $0x20] sm:$0xff]
    %v2153 = vld [vmem:[%s4 + $0x28] sm:$0xff]
    %v2154 = vld [vmem:[%s4 + $0x30] sm:$0xff]
    %v2155 = vld [vmem:[%s4 + $0x38] sm:$0xff]
    %v2156 = vld [vmem:[%s4 + $0x40] sm:$0xff]
    %v2157 = vld [vmem:[%s4 + $0x48] sm:$0xff]
    %v2158 = vld [vmem:[%s4 + $0x50] sm:$0xff]
    %v2159 = vld [vmem:[%s4 + $0x58] sm:$0xff]
    %v2160 = vld [vmem:[%s4 + $0x60] sm:$0xff]
    %v2161 = vld [vmem:[%s4 + $0x68] sm:$0xff]
    %v2162 = vld [vmem:[%s4 + $0x70] sm:$0xff]
    %v2163 = vld [vmem:[%s4 + $0x78] sm:$0xff]
    %v2164 = vld [vmem:[%s5] sm:$0x1]
    %v2166 = vlaneseq
    %v2167 = vshrl.u32 %v2166, 7
    %v2168 = vsub.s32 0, %v2167
    %v2169 = vrot.slane %v2164, %v2168
    %2171 = vmatprep.subr.mxu0 0.0
    %2172 = vmatpush1.msra.mxu0 %v2148
    %2173 = vmatprep.subr.mxu0 0.0
    %2174 = vmatpush1.msra.mxu0 %v2149
    %2175 = vmatprep.subr.mxu0 0.0
    %2176 = vmatpush1.msra.mxu0 %v2150
    %2177 = vmatprep.subr.mxu0 0.0
    %2178 = vmatpush1.msra.mxu0 %v2151
    %2179 = vmatprep.subr.mxu0 0.0
    %2180 = vmatpush1.msra.mxu0 %v2152
    %2181 = vmatprep.subr.mxu0 0.0
    %2182 = vmatpush1.msra.mxu0 %v2153
    %2183 = vmatprep.subr.mxu0 0.0
    %2184 = vmatpush1.msra.mxu0 %v2154
    %2185 = vmatprep.subr.mxu0 0.0
    %2186 = vmatpush1.msra.mxu0 %v2155
    %2187 = vmatprep.subr.mxu0 0.0
    %2188 = vmatpush1.msra.mxu0 %v2156
    %2189 = vmatprep.subr.mxu0 0.0
    %2190 = vmatpush1.msra.mxu0 %v2157
    %2191 = vmatprep.subr.mxu0 0.0
    %2192 = vmatpush1.msra.mxu0 %v2158
    %2193 = vmatprep.subr.mxu0 0.0
    %2194 = vmatpush1.msra.mxu0 %v2159
    %2195 = vmatprep.subr.mxu0 0.0
    %2196 = vmatpush1.msra.mxu0 %v2160
    %2197 = vmatprep.subr.mxu0 0.0
    %2198 = vmatpush1.msra.mxu0 %v2161
    %2199 = vmatprep.subr.mxu0 0.0
    %2200 = vmatpush1.msra.mxu0 %v2162
    %2201 = vmatprep.subr.mxu0 0.0
    %2202 = vmatpush1.msra.mxu0 %v2163
    %2203 = vmatprep.subr.mxu0 0.0
    %2204 = vmatpush1.msra.mxu0 0.0
    %2205 = vmatprep.subr.mxu0 0.0
    %2206 = vmatpush1.msra.mxu0 0.0
    %2207 = vmatprep.subr.mxu0 0.0
    %2208 = vmatpush1.msra.mxu0 0.0
    %2209 = vmatprep.subr.mxu0 0.0
    %2210 = vmatpush1.msra.mxu0 0.0
    %2211 = vmatprep.subr.mxu0 0.0
    %2212 = vmatpush1.msra.mxu0 0.0
    %2213 = vmatprep.subr.mxu0 0.0
    %2214 = vmatpush1.msra.mxu0 0.0
    %2215 = vmatprep.subr.mxu0 0.0
    %2216 = vmatpush1.msra.mxu0 0.0
    %2217 = vmatprep.subr.mxu0 0.0
    %2218 = vmatpush1.msra.mxu0 0.0
    %2219 = vmatprep.subr.mxu0 0.0
    %2220 = vmatpush1.msra.mxu0 0.0
    %2221 = vmatprep.subr.mxu0 0.0
    %2222 = vmatpush1.msra.mxu0 0.0
    %2223 = vmatprep.subr.mxu0 0.0
    %2224 = vmatpush1.msra.mxu0 0.0
    %2225 = vmatprep.subr.mxu0 0.0
    %2226 = vmatpush1.msra.mxu0 0.0
    %2227 = vmatprep.subr.mxu0 0.0
    %2228 = vmatpush1.msra.mxu0 0.0
    %2229 = vmatprep.subr.mxu0 0.0
    %2230 = vmatpush1.msra.mxu0 0.0
    %2231 = vmatprep.subr.mxu0 0.0
    %2232 = vmatpush1.msra.mxu0 0.0
    %2233 = vmatprep.subr.mxu0 0.0
    %2234 = vmatpush1.msra.mxu0 0.0
    %2235 = vmatprep.mubr.f32.mxu0 0.0
    %2236 = vmatmul.mubr.f32.gmra.mrb[0].mxu0 %v2147
    %v2237 = vpop.f32.mrb[0].mxu0
    %v2238 = vadd.f32 %v2169, %v2237
    %v2239 = vpop.f32.mrb[0].mxu0
    %2240 = vdwg.mxu0
    %vm2241 = vcmask 33792
    %v2242 = vsel %vm2241, %v2238, -inf
    %2243 = vmax.xlane.f32.xlu0 %v2242
    %v2244 = vpop.xlane.xlu0 %2243
    %v2245 = vsub.f32 %v2238, %v2244
    %v2246 = vmul.f32 %v2245, 1.442695
    %v2247 = vpow.pop %v2246
    %v2248 = vsel %vm2241, %v2247, 0.0
    %2249 = vadd.xlane.f32.xlu0 %v2248
    %v2250 = vpop.xlane.xlu0 %2249
    %v2251 = vrcp.pop %v2250
    %v2252 = vmul.f32 %v2247, %v2251
    %2253 = vst.msk [vmem:[#allocation5] sm:$0x3] %vm2241, %v2252
    // Predicated region
    $region30: #{lstm_forward.1} parent=1 // pred_check
      _
    $region31: #{lstm_forward.1} parent=1 // pred_check_branch
      %2255 = sbr.rel (0) target = $region33
    $region32: #{lstm_forward.1} parent=1 // pred_region
      %s2257 = ssub.s32 32, 32
      %2258 = vsyncadd [#allocation4], %s2257
      %s2260 = sshll.u32 [#allocation5], 4
      %s2261 = int_to_ptr.vmem [resolvable:$true] %s2260
      %2263 = dma.vmem_to_hbm [thread:$0]  %s2261, 32, %s6, [#allocation4]
    $region33: #{lstm_forward.1} parent=1 // pred_fallthru
      _
    // Predicated region
    $region34: #{lstm_forward.1} parent=1 // pred_check
      _
    $region35: #{lstm_forward.1} parent=1 // pred_check_branch
      %2265 = sbr.rel (0) target = $region37
    $region36: #{lstm_forward.1} parent=1 // pred_region
      %2266 = dma.done [#allocation4], 32
    $region37: #{lstm_forward.1} parent=1 // pred_fallthru
      _
    %2267 = vsyncpa [#allocation3], 1
    %2268 = vsyncpa [#allocation4], 1

</llo_original>
